<compile_context>
chip_gen: v7x
topology: tpu7x:2x2x1
jax: 0.10.0
libtpu: 0.0.40
codegen_flags: <defaults>
</compile_context>

<pallas_src>
import jax
import jax.numpy as jnp
from jax.experimental import pallas as pl
from jax.experimental.pallas import tpu as pltpu

N_VIEWS = 25  # fixed by nn.Linear(25, 1) in the PyTorch module


# ---------------------------------------------------------------------------
# One fused kernel.  Grid: (P // tk,) over the image-pixel contraction.
#   per step k:
#     sv_comb[b,p] = sum_n sv[b,n,p]*(1/N + fc_w[n]) + fc_b     (VPU/XLU, f32)
#     acc_sat     += img_tile  @ sat_img_w_tile                  (MXU, f32 acc)
#     acc_sv      += sv_comb   @ sv_img_w_tile                   (MXU, f32 acc)
#   k == last:
#     text towers, + biases, softmax gate, residual, packed store.
# ---------------------------------------------------------------------------
def _fused_forward_kernel(fcb_ref, coeff_ref, img_ref, txt_ref, sv_ref,
                          svtxt_ref, sat_iw_ref, sat_tw_ref, sv_iw_ref,
                          sv_tw_ref, bias_ref, out_ref,
                          acc_sat_ref, acc_sv_ref):
    k = pl.program_id(0)
    nk = pl.num_programs(0)
    B = acc_sat_ref.shape[0]

    @pl.when(k == 0)
    def _init():
        acc_sat_ref[...] = jnp.zeros_like(acc_sat_ref)
        acc_sv_ref[...] = jnp.zeros_like(acc_sv_ref)

    # 25-view aggregation for this pixel slab only (each pixel combined once
    # per call, exact f32; mean folded into `coeff`, Linear bias = fc_b).
    sv_comb = jnp.sum(sv_ref[...] * coeff_ref[...], axis=1) + fcb_ref[0]  # (B, tk)

    acc_sat_ref[...] += jnp.dot(img_ref[...], sat_iw_ref[...],
                                preferred_element_type=jnp.float32)
    acc_sv_ref[...] += jnp.dot(sv_comb.astype(jnp.bfloat16), sv_iw_ref[...],
                               preferred_element_type=jnp.float32)

    @pl.when(k == nk - 1)
    def _finalize():
        # Text towers: token-mean in f32, bf16 MXU dot — computed once per call.
        sat_txt = jnp.dot(jnp.mean(txt_ref[...], axis=1).astype(jnp.bfloat16),
                          sat_tw_ref[...],
                          preferred_element_type=jnp.float32) + bias_ref[1:2, :]
        sv_txt = jnp.dot(jnp.mean(svtxt_ref[...], axis=1).astype(jnp.bfloat16),
                         sv_tw_ref[...],
                         preferred_element_type=jnp.float32) + bias_ref[3:4, :]
        sat_img = acc_sat_ref[...] + bias_ref[0:1, :]
        sv_img = acc_sv_ref[...] + bias_ref[2:3, :]

        # Softmax gate over the (full, untiled) feature axis + residual.
        m = jnp.max(sv_img, axis=1, keepdims=True)
        e = jnp.exp(sv_img - m)
        beta = e / jnp.sum(e, axis=1, keepdims=True)   # exact recip: (B,1) denom
        sv_img = beta * sv_img
        sat_img = sat_img + sv_img

        # Packed (4B, D) slab: one lane-dense writeback instead of 4 outputs.
        out_ref[0 * B:1 * B, :] = sat_img
        out_ref[1 * B:2 * B, :] = sat_txt
        out_ref[2 * B:3 * B, :] = sv_img
        out_ref[3 * B:4 * B, :] = sv_txt


def fused_forward(img_bf16, texts, sv_f32, sv_texts, coeff, fc_b,
                  sat_img_w, sat_txt_w, sv_img_w, sv_txt_w, biases, *, tk=None):
    B, P = img_bf16.shape
    _, L, E = texts.shape
    N = sv_f32.shape[1]
    D = sat_img_w.shape[1]
    if tk is None:  # K tile of the pixel contraction; must divide P
        tk = next((t for t in (512, 256, 128) if P % t == 0), P)
    nk = P // tk

    # Per-step VMEM (double-buffered K-tiled operands + resident extras) is
    # ~1.5 MiB at these shapes; the explicit limit leaves headroom on every
    # generation (16 MiB default scoped on v5e would also have sufficed).
    return pl.pallas_call(
        _fused_forward_kernel,
        out_shape=jax.ShapeDtypeStruct((4 * B, D), jnp.float32),
        grid=(nk,),
        in_specs=[
            pl.BlockSpec(memory_space=pltpu.MemorySpace.SMEM),   # fc_layer bias (scalar)
            pl.BlockSpec((N, 1), lambda k: (0, 0)),              # folded view coeffs
            pl.BlockSpec((B, tk), lambda k: (0, k)),             # sat image (bf16), K-tiled
            pl.BlockSpec((B, L, E), lambda k: (0, 0, 0)),        # sat text tokens (f32)
            pl.BlockSpec((B, N, tk), lambda k: (0, 0, k)),       # 25 street views, K-tiled
            pl.BlockSpec((B, L, E), lambda k: (0, 0, 0)),        # sv text tokens (f32)
            pl.BlockSpec((tk, D), lambda k: (k, 0)),             # sat img W (bf16), K-tiled
            pl.BlockSpec((E, D), lambda k: (0, 0)),              # sat txt W (bf16)
            pl.BlockSpec((tk, D), lambda k: (k, 0)),             # sv  img W (bf16), K-tiled
            pl.BlockSpec((E, D), lambda k: (0, 0)),              # sv  txt W (bf16)
            pl.BlockSpec((4, D), lambda k: (0, 0)),              # stacked output biases
        ],
        out_specs=pl.BlockSpec((4 * B, D), lambda k: (0, 0)),
        scratch_shapes=[pltpu.VMEM((B, D), jnp.float32),          # acc: sat image feats
                        pltpu.VMEM((B, D), jnp.float32)],         # acc: sv  image feats
        compiler_params=pltpu.CompilerParams(
            dimension_semantics=("arbitrary",),   # K is a reduction axis
            vmem_limit_bytes=32 * 1024 * 1024),
    )(jnp.asarray(fc_b, jnp.float32).reshape(1), coeff, img_bf16, texts,
      sv_f32, sv_texts, sat_img_w, sat_txt_w, sv_img_w, sv_txt_w, biases)


# ---------------------------------------------------------------------------
# Stand-in CLIP parameters (external constructor dependency in PyTorch)
# ---------------------------------------------------------------------------
def make_clip_params(key, in_pixels, txt_embed, feat_dim):
    k1, k2, k3, k4 = jax.random.split(key, 4)
    return {
        # bf16 weights: these linears are weight-bandwidth bound; bf16 is the
        # MXU-native dtype on v5e/v6e/v7x and halves streamed bytes.
        "img_w": (0.02 * jax.random.normal(k1, (in_pixels, feat_dim),
                                           jnp.float32)).astype(jnp.bfloat16),
        "img_b": 0.02 * jax.random.normal(k2, (feat_dim,), jnp.float32),
        "txt_w": (0.02 * jax.random.normal(k3, (txt_embed, feat_dim),
                                           jnp.float32)).astype(jnp.bfloat16),
        "txt_b": 0.02 * jax.random.normal(k4, (feat_dim,), jnp.float32),
    }


# ---------------------------------------------------------------------------
# The module
# ---------------------------------------------------------------------------
class MultiGranularityStructural:
    def __init__(self, key, img_chw=(4, 16, 16), txt_embed=32, feat_dim=256):
        C, H, W = img_chw
        P = C * H * W
        k_sat, k_sv, k_fc = jax.random.split(key, 3)
        self.sat_params = make_clip_params(k_sat, P, txt_embed, feat_dim)
        self.sv_params = make_clip_params(k_sv, P, txt_embed, feat_dim)
        kw, kb = jax.random.split(k_fc)
        lim = 1.0 / (N_VIEWS ** 0.5)
        self.fc_w = jax.random.uniform(kw, (N_VIEWS,), jnp.float32, -lim, lim)
        self.fc_b = jax.random.uniform(kb, (), jnp.float32, -lim, lim)
        # Fusion constants: fold mean(1/N) into the per-view weight; stack biases.
        self.coeff = (self.fc_w + 1.0 / N_VIEWS).reshape(N_VIEWS, 1)
        self.biases = jnp.stack([self.sat_params["img_b"],
                                 self.sat_params["txt_b"],
                                 self.sv_params["img_b"],
                                 self.sv_params["txt_b"]], axis=0)
        # TODO(synk): coordinate_fc_layer and gps_encoder (GeoCLIP) are created
        # in the PyTorch __init__ but never used in forward(); omitted.

    def __call__(self, images, texts, sv_images, sv_texts, sv_coords):
        del sv_coords  # unused in the PyTorch forward as well
        B, N, C, H, W = sv_images.shape
        P = C * H * W
        # bf16 at the DMA boundary for the big image activations; keep the
        # 25-view tensor f32 so the view combine stays exact inside the kernel.
        img_bf16 = images.reshape(B, P).astype(jnp.bfloat16)
        sv_f32 = sv_images.reshape(B, N, P).astype(jnp.float32)

        packed = fused_forward(
            img_bf16, texts.astype(jnp.float32),
            sv_f32, sv_texts.astype(jnp.float32),
            self.coeff, self.fc_b,
            self.sat_params["img_w"], self.sat_params["txt_w"],
            self.sv_params["img_w"], self.sv_params["txt_w"],
            self.biases)

        sat_img = packed[0 * B:1 * B]
        sat_txt = packed[1 * B:2 * B]
        sv_img = packed[2 * B:3 * B]
        sv_txt = packed[3 * B:4 * B]
        sat_out = {"image_features": sat_img, "text_features": sat_txt}
        sv_out = {"image_features": sv_img, "text_features": sv_txt}
        return sat_out, sv_out


# ---------------------------------------------------------------------------
# Pure-JAX references.
#   full_f32=False: same bf16 casts as the kernel  -> tight self-consistency.
#   full_f32=True : all-f32 activation math (same stored weights) -> parity
#                   check against the f32 PyTorch-style forward semantics.
# ---------------------------------------------------------------------------
def reference(model, images, texts, sv_images, sv_texts, *, full_f32=False):
    act = (lambda x: x.astype(jnp.float32)) if full_f32 else \
          (lambda x: x.astype(jnp.bfloat16))
    wgt = (lambda w: w.astype(jnp.float32)) if full_f32 else (lambda w: w)

    B = images.shape[0]
    sat_p, sv_p = model.sat_params, model.sv_params

    img = images.reshape(B, -1).astype(jnp.float32)
    sat_imf = jnp.dot(act(img), wgt(sat_p["img_w"]),
                      preferred_element_type=jnp.float32) + sat_p["img_b"]
    sat_txf = jnp.dot(act(texts.mean(axis=1)), wgt(sat_p["txt_w"]),
                      preferred_element_type=jnp.float32) + sat_p["txt_b"]

    sv_flat = sv_images.reshape(B, N_VIEWS, -1).astype(jnp.float32)
    # mean over views + nn.Linear(25, 1) on the view axis (exact f32).
    combined = jnp.sum(sv_flat * model.coeff[None, :, :], axis=1) + model.fc_b
    sv_imf = jnp.dot(act(combined), wgt(sv_p["img_w"]),
                     preferred_element_type=jnp.float32) + sv_p["img_b"]
    sv_txf = jnp.dot(act(sv_texts.mean(axis=1)), wgt(sv_p["txt_w"]),
                     preferred_element_type=jnp.float32) + sv_p["txt_b"]

    beta = jax.nn.softmax(sv_imf, axis=1)
    sv_imf = beta * sv_imf
    sat_imf = sat_imf + sv_imf
    return sat_imf, sat_txf, sv_imf, sv_txf


if __name__ == "__main__":
    key = jax.random.PRNGKey(0)
    k_model, k_img, k_txt, k_svi, k_svt, k_crd = jax.random.split(key, 6)

    B, C, H, W = 2, 4, 16, 16
    L, E, D = 8, 32, 256

    model = MultiGranularityStructural(k_model, (C, H, W), E, D)

    images = jax.random.normal(k_img, (B, C, H, W), jnp.float32)
    texts = jax.random.normal(k_txt, (B, L, E), jnp.float32)
    sv_images = jax.random.normal(k_svi, (B, N_VIEWS, C, H, W), jnp.float32)
    sv_texts = jax.random.normal(k_svt, (B, L, E), jnp.float32)
    sv_coords = jax.random.normal(k_crd, (B, 2), jnp.float32)  # unused (matches PyTorch)

    fwd = jax.jit(lambda im, tx, svi, svt, crd: model(im, tx, svi, svt, crd))
    sat_out, sv_out = fwd(images, texts, sv_images, sv_texts, sv_coords)
    jax.block_until_ready((sat_out, sv_out))

    # Check 1: tight self-consistency (same bf16 boundary casts as the kernel).
    r = reference(model, images, texts, sv_images, sv_texts, full_f32=False)
    tol = dict(rtol=1e-3, atol=1e-3)
    assert jnp.allclose(sat_out["image_features"], r[0], **tol)
    assert jnp.allclose(sat_out["text_features"], r[1], **tol)
    assert jnp.allclose(sv_out["image_features"], r[2], **tol)
    assert jnp.allclose(sv_out["text_features"], r[3], **tol)

    # Check 2: parity with all-f32 activation math (same stored weights).
    # Tolerance sized for bf16 rounding of a K=1024 contraction.
    r32 = reference(model, images, texts, sv_images, sv_texts, full_f32=True)
    tol32 = dict(rtol=3e-2, atol=3e-2)
    assert jnp.allclose(sat_out["image_features"], r32[0], **tol32)
    assert jnp.allclose(sat_out["text_features"], r32[1], **tol32)
    assert jnp.allclose(sv_out["image_features"], r32[2], **tol32)
    assert jnp.allclose(sv_out["text_features"], r32[3], **tol32)

    print("KERNEL_OK")
</pallas_src>

<mosaic_0001>
module attributes {stable_mosaic.version = 11 : i64} {
  func.func @_fused_forward_kernel(%arg0: i32, %arg1: memref<1xf32, #tpu.memory_space<smem>>, %arg2: memref<25x1xf32, #tpu.memory_space<vmem>>, %arg3: memref<2x512xbf16, #tpu.memory_space<vmem>>, %arg4: memref<2x8x32xf32, #tpu.memory_space<vmem>>, %arg5: memref<2x25x512xf32, #tpu.memory_space<vmem>>, %arg6: memref<2x8x32xf32, #tpu.memory_space<vmem>>, %arg7: memref<512x256xbf16, #tpu.memory_space<vmem>>, %arg8: memref<32x256xbf16, #tpu.memory_space<vmem>>, %arg9: memref<512x256xbf16, #tpu.memory_space<vmem>>, %arg10: memref<32x256xbf16, #tpu.memory_space<vmem>>, %arg11: memref<4x256xf32, #tpu.memory_space<vmem>>, %arg12: memref<8x256xf32, #tpu.memory_space<vmem>>, %arg13: memref<2x256xf32, #tpu.memory_space<vmem>>, %arg14: memref<2x256xf32, #tpu.memory_space<vmem>>) attributes {dimension_semantics = [#tpu.dimension_semantics<arbitrary>], iteration_bounds = array<i64: 2>, scalar_prefetch = 0 : i64, scratch_operands = 2 : i64, tpu.core_type = #tpu.core_type<tc>, window_params = [{transform_indices = @transform_0, window_bounds = array<i64: 1>}, {pipeline_mode = #tpu.pipeline_mode<synchronous>, transform_indices = @transform_1, window_bounds = array<i64: 25, 1>}, {transform_indices = @transform_2, window_bounds = array<i64: 2, 512>}, {pipeline_mode = #tpu.pipeline_mode<synchronous>, transform_indices = @transform_3, window_bounds = array<i64: 2, 8, 32>}, {transform_indices = @transform_4, window_bounds = array<i64: 2, 25, 512>}, {pipeline_mode = #tpu.pipeline_mode<synchronous>, transform_indices = @transform_5, window_bounds = array<i64: 2, 8, 32>}, {transform_indices = @transform_6, window_bounds = array<i64: 512, 256>}, {pipeline_mode = #tpu.pipeline_mode<synchronous>, transform_indices = @transform_7, window_bounds = array<i64: 32, 256>}, {transform_indices = @transform_8, window_bounds = array<i64: 512, 256>}, {pipeline_mode = #tpu.pipeline_mode<synchronous>, transform_indices = @transform_9, window_bounds = array<i64: 32, 256>}, {pipeline_mode = #tpu.pipeline_mode<synchronous>, transform_indices = @transform_10, window_bounds = array<i64: 4, 256>}, {pipeline_mode = #tpu.pipeline_mode<synchronous>, transform_indices = @transform_11, window_bounds = array<i64: 8, 256>}]} {
    %c0_i32 = arith.constant 0 : i32
    %0 = arith.cmpi eq, %arg0, %c0_i32 : i32
    %1 = arith.extui %0 : i1 to i32
    %c0_i32_0 = arith.constant 0 : i32
    %2 = arith.cmpi ne, %1, %c0_i32_0 : i32
    scf.if %2 {
      %cst_23 = arith.constant 0.000000e+00 : f32
      %27 = vector.broadcast %cst_23 : f32 to vector<2x256xf32>
      %c0_24 = arith.constant 0 : index
      %c0_25 = arith.constant 0 : index
      %28 = vector.load %arg13[%c0_24, %c0_25] : memref<2x256xf32, #tpu.memory_space<vmem>>, vector<2x256xf32>
      tpu.vector_store %arg13[%c0_24, %c0_25], %27 {strides = array<i32>} : memref<2x256xf32, #tpu.memory_space<vmem>>, vector<2x256xf32>,
      %cst_26 = arith.constant 0.000000e+00 : f32
      %29 = vector.broadcast %cst_26 : f32 to vector<2x256xf32>
      %c0_27 = arith.constant 0 : index
      %c0_28 = arith.constant 0 : index
      %30 = vector.load %arg14[%c0_27, %c0_28] : memref<2x256xf32, #tpu.memory_space<vmem>>, vector<2x256xf32>
      tpu.vector_store %arg14[%c0_27, %c0_28], %29 {strides = array<i32>} : memref<2x256xf32, #tpu.memory_space<vmem>>, vector<2x256xf32>,
    } else {
    }
    %c0 = arith.constant 0 : index
    %c0_1 = arith.constant 0 : index
    %c0_2 = arith.constant 0 : index
    %3 = vector.load %arg5[%c0, %c0_1, %c0_2] : memref<2x25x512xf32, #tpu.memory_space<vmem>>, vector<2x25x512xf32>
    %c0_3 = arith.constant 0 : index
    %c0_4 = arith.constant 0 : index
    %4 = vector.load %arg2[%c0_3, %c0_4] : memref<25x1xf32, #tpu.memory_space<vmem>>, vector<25x1xf32>
    %5 = vector.shape_cast %4 : vector<25x1xf32> to vector<1x25x1xf32>
    %6 = vector.broadcast %5 : vector<1x25x1xf32> to vector<2x25x512xf32>
    %7 = arith.mulf %3, %6 : vector<2x25x512xf32>
    %cst = arith.constant dense<0.000000e+00> : vector<2x512xf32>
    %8 = vector.multi_reduction <add>, %7, %cst [1] : vector<2x25x512xf32> to vector<2x512xf32>
    %c0_5 = arith.constant 0 : index
    %9 = memref.load %arg1[%c0_5] : memref<1xf32, #tpu.memory_space<smem>>
    %10 = vector.broadcast %9 : f32 to vector<2x512xf32>
    %11 = arith.addf %8, %10 : vector<2x512xf32>
    %c0_6 = arith.constant 0 : index
    %c0_7 = arith.constant 0 : index
    %12 = vector.load %arg13[%c0_6, %c0_7] : memref<2x256xf32, #tpu.memory_space<vmem>>, vector<2x256xf32>
    %c0_8 = arith.constant 0 : index
    %c0_9 = arith.constant 0 : index
    %13 = vector.load %arg3[%c0_8, %c0_9] : memref<2x512xbf16, #tpu.memory_space<vmem>>, vector<2x512xbf16>
    %c0_10 = arith.constant 0 : index
    %c0_11 = arith.constant 0 : index
    %14 = vector.load %arg7[%c0_10, %c0_11] : memref<512x256xbf16, #tpu.memory_space<vmem>>, vector<512x256xbf16>
    %cst_12 = arith.constant dense<0.000000e+00> : vector<2x256xf32>
    %15 = tpu.matmul %13, %14, %cst_12 {dimension_numbers = #tpu.dot_dimension_numbers<[1], [0], [0], [1], [0, 0, 1, 1], [], []>} : vector<2x512xbf16>, vector<512x256xbf16>, vector<2x256xf32> -> vector<2x256xf32>
    %16 = arith.addf %12, %15 : vector<2x256xf32>
    %c0_13 = arith.constant 0 : index
    %c0_14 = arith.constant 0 : index
    %17 = vector.load %arg13[%c0_13, %c0_14] : memref<2x256xf32, #tpu.memory_space<vmem>>, vector<2x256xf32>
    tpu.vector_store %arg13[%c0_13, %c0_14], %16 {strides = array<i32>} : memref<2x256xf32, #tpu.memory_space<vmem>>, vector<2x256xf32>,
    %c0_15 = arith.constant 0 : index
    %c0_16 = arith.constant 0 : index
    %18 = vector.load %arg14[%c0_15, %c0_16] : memref<2x256xf32, #tpu.memory_space<vmem>>, vector<2x256xf32>
    %19 = arith.truncf %11 : vector<2x512xf32> to vector<2x512xbf16>
    %c0_17 = arith.constant 0 : index
    %c0_18 = arith.constant 0 : index
    %20 = vector.load %arg9[%c0_17, %c0_18] : memref<512x256xbf16, #tpu.memory_space<vmem>>, vector<512x256xbf16>
    %cst_19 = arith.constant dense<0.000000e+00> : vector<2x256xf32>
    %21 = tpu.matmul %19, %20, %cst_19 {dimension_numbers = #tpu.dot_dimension_numbers<[1], [0], [0], [1], [0, 0, 1, 1], [], []>} : vector<2x512xbf16>, vector<512x256xbf16>, vector<2x256xf32> -> vector<2x256xf32>
    %22 = arith.addf %18, %21 : vector<2x256xf32>
    %c0_20 = arith.constant 0 : index
    %c0_21 = arith.constant 0 : index
    %23 = vector.load %arg14[%c0_20, %c0_21] : memref<2x256xf32, #tpu.memory_space<vmem>>, vector<2x256xf32>
    tpu.vector_store %arg14[%c0_20, %c0_21], %22 {strides = array<i32>} : memref<2x256xf32, #tpu.memory_space<vmem>>, vector<2x256xf32>,
    %c1_i32 = arith.constant 1 : i32
    %24 = arith.cmpi eq, %arg0, %c1_i32 : i32
    %25 = arith.extui %24 : i1 to i32
    %c0_i32_22 = arith.constant 0 : i32
    %26 = arith.cmpi ne, %25, %c0_i32_22 : i32
    scf.if %26 {
      %c0_23 = arith.constant 0 : index
      %c0_24 = arith.constant 0 : index
      %c0_25 = arith.constant 0 : index
      %27 = vector.load %arg4[%c0_23, %c0_24, %c0_25] : memref<2x8x32xf32, #tpu.memory_space<vmem>>, vector<2x8x32xf32>
      %cst_26 = arith.constant dense<0.000000e+00> : vector<2x32xf32>
      %28 = vector.multi_reduction <add>, %27, %cst_26 [1] : vector<2x8x32xf32> to vector<2x32xf32>
      %cst_27 = arith.constant 8.000000e+00 : f32
      %29 = vector.broadcast %cst_27 : f32 to vector<2x32xf32>
      %30 = arith.divf %28, %29 : vector<2x32xf32>
      %31 = arith.truncf %30 : vector<2x32xf32> to vector<2x32xbf16>
      %c0_28 = arith.constant 0 : index
      %c0_29 = arith.constant 0 : index
      %32 = vector.load %arg8[%c0_28, %c0_29] : memref<32x256xbf16, #tpu.memory_space<vmem>>, vector<32x256xbf16>
      %cst_30 = arith.constant dense<0.000000e+00> : vector<2x256xf32>
      %33 = tpu.matmul %31, %32, %cst_30 {dimension_numbers = #tpu.dot_dimension_numbers<[1], [0], [0], [1], [0, 0, 1, 1], [], []>} : vector<2x32xbf16>, vector<32x256xbf16>, vector<2x256xf32> -> vector<2x256xf32>
      %c1 = arith.constant 1 : index
      %c0_31 = arith.constant 0 : index
      %34 = vector.load %arg11[%c1, %c0_31] : memref<4x256xf32, #tpu.memory_space<vmem>>, vector<1x256xf32>
      %35 = vector.broadcast %34 : vector<1x256xf32> to vector<2x256xf32>
      %36 = arith.addf %33, %35 : vector<2x256xf32>
      %c0_32 = arith.constant 0 : index
      %c0_33 = arith.constant 0 : index
      %c0_34 = arith.constant 0 : index
      %37 = vector.load %arg6[%c0_32, %c0_33, %c0_34] : memref<2x8x32xf32, #tpu.memory_space<vmem>>, vector<2x8x32xf32>
      %cst_35 = arith.constant dense<0.000000e+00> : vector<2x32xf32>
      %38 = vector.multi_reduction <add>, %37, %cst_35 [1] : vector<2x8x32xf32> to vector<2x32xf32>
      %cst_36 = arith.constant 8.000000e+00 : f32
      %39 = vector.broadcast %cst_36 : f32 to vector<2x32xf32>
      %40 = arith.divf %38, %39 : vector<2x32xf32>
      %41 = arith.truncf %40 : vector<2x32xf32> to vector<2x32xbf16>
      %c0_37 = arith.constant 0 : index
      %c0_38 = arith.constant 0 : index
      %42 = vector.load %arg10[%c0_37, %c0_38] : memref<32x256xbf16, #tpu.memory_space<vmem>>, vector<32x256xbf16>
      %cst_39 = arith.constant dense<0.000000e+00> : vector<2x256xf32>
      %43 = tpu.matmul %41, %42, %cst_39 {dimension_numbers = #tpu.dot_dimension_numbers<[1], [0], [0], [1], [0, 0, 1, 1], [], []>} : vector<2x32xbf16>, vector<32x256xbf16>, vector<2x256xf32> -> vector<2x256xf32>
      %c3 = arith.constant 3 : index
      %c0_40 = arith.constant 0 : index
      %44 = vector.load %arg11[%c3, %c0_40] : memref<4x256xf32, #tpu.memory_space<vmem>>, vector<1x256xf32>
      %45 = vector.broadcast %44 : vector<1x256xf32> to vector<2x256xf32>
      %46 = arith.addf %43, %45 : vector<2x256xf32>
      %c0_41 = arith.constant 0 : index
      %c0_42 = arith.constant 0 : index
      %47 = vector.load %arg13[%c0_41, %c0_42] : memref<2x256xf32, #tpu.memory_space<vmem>>, vector<2x256xf32>
      %c0_43 = arith.constant 0 : index
      %c0_44 = arith.constant 0 : index
      %48 = vector.load %arg11[%c0_43, %c0_44] : memref<4x256xf32, #tpu.memory_space<vmem>>, vector<1x256xf32>
      %49 = vector.broadcast %48 : vector<1x256xf32> to vector<2x256xf32>
      %50 = arith.addf %47, %49 : vector<2x256xf32>
      %c0_45 = arith.constant 0 : index
      %c0_46 = arith.constant 0 : index
      %51 = vector.load %arg14[%c0_45, %c0_46] : memref<2x256xf32, #tpu.memory_space<vmem>>, vector<2x256xf32>
      %c2 = arith.constant 2 : index
      %c0_47 = arith.constant 0 : index
      %52 = vector.load %arg11[%c2, %c0_47] : memref<4x256xf32, #tpu.memory_space<vmem>>, vector<1x256xf32>
      %53 = vector.broadcast %52 : vector<1x256xf32> to vector<2x256xf32>
      %54 = arith.addf %51, %53 : vector<2x256xf32>
      %cst_48 = arith.constant dense<0xFF800000> : vector<2xf32>
      %55 = vector.multi_reduction <maximumf>, %54, %cst_48 [1] : vector<2x256xf32> to vector<2xf32>
      %56 = vector.shape_cast %55 : vector<2xf32> to vector<2x1xf32>
      %57 = vector.broadcast %56 : vector<2x1xf32> to vector<2x256xf32>
      %58 = arith.subf %54, %57 : vector<2x256xf32>
      %59 = math.exp %58 : vector<2x256xf32>
      %cst_49 = arith.constant dense<0.000000e+00> : vector<2xf32>
      %60 = vector.multi_reduction <add>, %59, %cst_49 [1] : vector<2x256xf32> to vector<2xf32>
      %61 = vector.shape_cast %60 : vector<2xf32> to vector<2x1xf32>
      %62 = vector.broadcast %61 : vector<2x1xf32> to vector<2x256xf32>
      %63 = arith.divf %59, %62 : vector<2x256xf32>
      %64 = arith.mulf %63, %54 : vector<2x256xf32>
      %65 = arith.addf %50, %64 : vector<2x256xf32>
      %c0_50 = arith.constant 0 : index
      %c0_51 = arith.constant 0 : index
      %66 = vector.load %arg12[%c0_50, %c0_51] : memref<8x256xf32, #tpu.memory_space<vmem>>, vector<2x256xf32>
      tpu.vector_store %arg12[%c0_50, %c0_51], %65 {strides = array<i32>} : memref<8x256xf32, #tpu.memory_space<vmem>>, vector<2x256xf32>,
      %c2_52 = arith.constant 2 : index
      %c0_53 = arith.constant 0 : index
      %67 = vector.load %arg12[%c2_52, %c0_53] : memref<8x256xf32, #tpu.memory_space<vmem>>, vector<2x256xf32>
      tpu.vector_store %arg12[%c2_52, %c0_53], %36 {strides = array<i32>} : memref<8x256xf32, #tpu.memory_space<vmem>>, vector<2x256xf32>,
      %c4 = arith.constant 4 : index
      %c0_54 = arith.constant 0 : index
      %68 = vector.load %arg12[%c4, %c0_54] : memref<8x256xf32, #tpu.memory_space<vmem>>, vector<2x256xf32>
      tpu.vector_store %arg12[%c4, %c0_54], %64 {strides = array<i32>} : memref<8x256xf32, #tpu.memory_space<vmem>>, vector<2x256xf32>,
      %c6 = arith.constant 6 : index
      %c0_55 = arith.constant 0 : index
      %69 = vector.load %arg12[%c6, %c0_55] : memref<8x256xf32, #tpu.memory_space<vmem>>, vector<2x256xf32>
      tpu.vector_store %arg12[%c6, %c0_55], %46 {strides = array<i32>} : memref<8x256xf32, #tpu.memory_space<vmem>>, vector<2x256xf32>,
    } else {
    }
    return
  }
  func.func @transform_0(%arg0: i32) -> i32 {
    %c0_i32 = arith.constant 0 : i32
    %c0_i32_0 = arith.constant 0 : i32
    return %c0_i32 : i32
  }
  func.func @transform_1(%arg0: i32) -> (i32, i32) {
    %c0_i32 = arith.constant 0 : i32
    %c0_i32_0 = arith.constant 0 : i32
    %c0_i32_1 = arith.constant 0 : i32
    return %c0_i32, %c0_i32_0 : i32, i32
  }
  func.func @transform_2(%arg0: i32) -> (i32, i32) {
    %c0_i32 = arith.constant 0 : i32
    %c0_i32_0 = arith.constant 0 : i32
    return %c0_i32, %arg0 : i32, i32
  }
  func.func @transform_3(%arg0: i32) -> (i32, i32, i32) {
    %c0_i32 = arith.constant 0 : i32
    %c0_i32_0 = arith.constant 0 : i32
    %c0_i32_1 = arith.constant 0 : i32
    %c0_i32_2 = arith.constant 0 : i32
    return %c0_i32, %c0_i32_0, %c0_i32_1 : i32, i32, i32
  }
  func.func @transform_4(%arg0: i32) -> (i32, i32, i32) {
    %c0_i32 = arith.constant 0 : i32
    %c0_i32_0 = arith.constant 0 : i32
    %c0_i32_1 = arith.constant 0 : i32
    return %c0_i32, %c0_i32_0, %arg0 : i32, i32, i32
  }
  func.func @transform_5(%arg0: i32) -> (i32, i32, i32) {
    %c0_i32 = arith.constant 0 : i32
    %c0_i32_0 = arith.constant 0 : i32
    %c0_i32_1 = arith.constant 0 : i32
    %c0_i32_2 = arith.constant 0 : i32
    return %c0_i32, %c0_i32_0, %c0_i32_1 : i32, i32, i32
  }
  func.func @transform_6(%arg0: i32) -> (i32, i32) {
    %c0_i32 = arith.constant 0 : i32
    %c0_i32_0 = arith.constant 0 : i32
    return %arg0, %c0_i32 : i32, i32
  }
  func.func @transform_7(%arg0: i32) -> (i32, i32) {
    %c0_i32 = arith.constant 0 : i32
    %c0_i32_0 = arith.constant 0 : i32
    %c0_i32_1 = arith.constant 0 : i32
    return %c0_i32, %c0_i32_0 : i32, i32
  }
  func.func @transform_8(%arg0: i32) -> (i32, i32) {
    %c0_i32 = arith.constant 0 : i32
    %c0_i32_0 = arith.constant 0 : i32
    return %arg0, %c0_i32 : i32, i32
  }
  func.func @transform_9(%arg0: i32) -> (i32, i32) {
    %c0_i32 = arith.constant 0 : i32
    %c0_i32_0 = arith.constant 0 : i32
    %c0_i32_1 = arith.constant 0 : i32
    return %c0_i32, %c0_i32_0 : i32, i32
  }
  func.func @transform_10(%arg0: i32) -> (i32, i32) {
    %c0_i32 = arith.constant 0 : i32
    %c0_i32_0 = arith.constant 0 : i32
    %c0_i32_1 = arith.constant 0 : i32
    return %c0_i32, %c0_i32_0 : i32, i32
  }
  func.func @transform_11(%arg0: i32) -> (i32, i32) {
    %c0_i32 = arith.constant 0 : i32
    %c0_i32_0 = arith.constant 0 : i32
    %c0_i32_1 = arith.constant 0 : i32
    return %c0_i32, %c0_i32_0 : i32, i32
  }
}

</mosaic_0001>

<llo_original>
// kernel: _lambda_.1
$region0: #{_lambda_.1}
  #allocation0 [shape = 'u32[]', space=smem, size = 0x4, offset = 0x4, fixed_abs, tag = 'smem constant byte address 0x4 - core index']
  #allocation1 [shape = 'u32[144,128]{1,0:T(1,128)}', space=vmem, size = 0x12000, scoped, tag = 'internal scratch']
  #allocation2 [shape = 'f32[2,256]{1,0:T(2,128)}', space=vmem, size = 0x800, scoped, tag = 'scratch operand']
  #allocation3 [shape = 'f32[2,256]{1,0:T(2,128)}', space=vmem, size = 0x800, scoped, tag = 'scratch operand']
  #allocation4 [shape = 'f32[1]{0:T(128)S(6)}', space=smem, size = 0x200, scoped, tag = 'scoped memory for _lambda_.1']
  %s0 = inlined_call_operand.<no memory space> [shape: f32[1], index: 0, kind: input, shape index: {}]
  %s1 = inlined_call_operand.vmem [shape: f32[25,1], index: 1, kind: input, shape index: {}]
  %s2 = inlined_call_operand.vmem [shape: bf16[2,1024], index: 2, kind: input, shape index: {}]
  %s3 = inlined_call_operand.vmem [shape: f32[2,8,32], index: 3, kind: input, shape index: {}]
  %s4 = inlined_call_operand.vmem [shape: f32[2,25,1024], index: 4, kind: input, shape index: {}]
  %s5 = inlined_call_operand.vmem [shape: f32[2,8,32], index: 5, kind: input, shape index: {}]
  %s6 = inlined_call_operand.vmem [shape: bf16[1024,256], index: 6, kind: input, shape index: {}]
  %s7 = inlined_call_operand.vmem [shape: bf16[32,256], index: 7, kind: input, shape index: {}]
  %s8 = inlined_call_operand.vmem [shape: bf16[1024,256], index: 8, kind: input, shape index: {}]
  %s9 = inlined_call_operand.vmem [shape: bf16[32,256], index: 9, kind: input, shape index: {}]
  %s10 = inlined_call_operand.vmem [shape: f32[4,256], index: 10, kind: input, shape index: {}]
  %s11 = inlined_call_operand.vmem [shape: f32[8,256], index: 11, kind: output, shape index: {}]
  %s12 = sld [smem:[#allocation0]]
  $region108: #{_lambda_.1} parent=0
    _
  %s14 = ssub.s32 1, %s12
  %s15 = scalar_select 0, %s14, %s12
  %16 = sst [smem:[#allocation4]] %s0
  $region1: #{_lambda_.1} parent=0
    #allocation5 [shape = 'u8[262144]{0}', space=vmem, size = 0x40000, scoped, tag = 'input window, operand 4']
    loop: start=0, step=1, limit=4
    $region2: #{_lambda_.1} parent=1 // loop_pre_header
      _
    $region3: #{_lambda_.1} parent=1 // loop_header
      %s18 = sphi 0, %s22
      %p19 = scmp.ge.s32.totalorder %s18, 4
      %s26 = sphi 0, %s26
      %s28 = sphi 0, %s26
      %s29 = sphi 0, %s28
      %s43 = sphi 0, %s29
      %s47 = sphi 0, %s47
      %s49 = sphi 0, %s47
      %s50 = sphi 0, %s49
      %s64 = sphi 0, %s50
      %s70 = sphi 0, %s72
      %s73 = sphi 0, %s70
      %s74 = sphi 0, %s73
      %s90 = sphi 0, %s74
      %s94 = sphi 0, %s94
      %s96 = sphi 0, %s94
      %s97 = sphi 0, %s96
      %s111 = sphi 0, %s97
      %s117 = sphi 0, %s119
      %s120 = sphi 0, %s117
      %s121 = sphi 0, %s120
      %s137 = sphi 0, %s121
      %s141 = sphi 0, %s141
      %s143 = sphi 0, %s141
      %s144 = sphi 0, %s143
      %s158 = sphi 0, %s144
      %s164 = sphi 0, %s166
      %s167 = sphi 0, %s164
      %s168 = sphi 0, %s167
      %s184 = sphi 0, %s168
      %s188 = sphi 0, %s188
      %s190 = sphi 0, %s188
      %s191 = sphi 0, %s190
      %s205 = sphi 0, %s191
      %s211 = sphi 0, %s213
      %s214 = sphi 0, %s211
      %s215 = sphi 0, %s214
      %s231 = sphi 0, %s215
      %s235 = sphi 0, %s235
      %s237 = sphi 0, %s235
      %s238 = sphi 0, %s237
      %s252 = sphi 0, %s238
      %s256 = sphi 0, %s256
      %s258 = sphi 0, %s256
      %s259 = sphi 0, %s258
      %s273 = sphi 0, %s259
      %s277 = sphi 0, %s277
      %s279 = sphi 0, %s277
      %s280 = sphi 0, %s279
      %s294 = sphi 0, %s280
    $region4: #{_lambda_.1} parent=1 // loop_header_branch
      %21 = sbr.rel (%p19) target = $region8
    $region5: #{_lambda_.1} parent=1 // loop_body
      %s23 = ssub.s32 %s18, 1
      %s24 = ssub.s32 %s18, 2
      %s25 = sadd.s32 %s18, 1
      %s27 = sadd.s32 %s26, 1
      %p30 = scmp.eq.s32.totalorder %s18, 1
      %p31 = scmp.ne.s32.totalorder %s26, %s28
      %p32 = scmp.eq.s32.totalorder %s18, 0
      %p33 = por %p31, %p32
      %p34 = scmp.ne.s32.totalorder %s26, %s28
      %p35 = scmp.eq.s32.totalorder %s23, 1
      %p36 = por %p34, %p35
      %p37 = scmp.ne.s32.totalorder %s28, %s29
      %p38 = scmp.eq.s32.totalorder %s23, 0
      %p39 = por %p37, %p38
      %p40 = scmp.ne.s32.totalorder %s28, %s29
      %p41 = scmp.eq.s32.totalorder %s24, 1
      %p42 = por %p40, %p41
      %p44 = scmp.ne.s32.totalorder %s29, %s43
      %p45 = scmp.eq.s32.totalorder %s24, 0
      %p46 = por %p44, %p45
      %s48 = sadd.s32 %s47, 1
      %p51 = scmp.eq.s32.totalorder %s18, 1
      %p52 = scmp.ne.s32.totalorder %s47, %s49
      %p53 = scmp.eq.s32.totalorder %s18, 0
      %p54 = por %p52, %p53
      %p55 = scmp.ne.s32.totalorder %s47, %s49
      %p56 = scmp.eq.s32.totalorder %s23, 1
      %p57 = por %p55, %p56
      %p58 = scmp.ne.s32.totalorder %s49, %s50
      %p59 = scmp.eq.s32.totalorder %s23, 0
      %p60 = por %p58, %p59
      %p61 = scmp.ne.s32.totalorder %s49, %s50
      %p62 = scmp.eq.s32.totalorder %s24, 1
      %p63 = por %p61, %p62
      %p65 = scmp.ne.s32.totalorder %s50, %s64
      %p66 = scmp.eq.s32.totalorder %s24, 0
      %p67 = por %p65, %p66
      %s68 = ssub.s32 %s18, %s25
      %p69 = scmp.eq.s32.totalorder %s68, 0
      %s71 = sadd.s32 %s70, 1
      %s72 = scalar_select %p69, %s70, %s71
      %p75 = pneg %p69
      %p76 = scmp.eq.s32.totalorder %s18, 1
      %p77 = por %p75, %p76
      %p78 = scmp.ne.s32.totalorder %s70, %s73
      %p79 = scmp.eq.s32.totalorder %s18, 0
      %p80 = por %p78, %p79
      %p81 = scmp.ne.s32.totalorder %s70, %s73
      %p82 = scmp.eq.s32.totalorder %s23, 1
      %p83 = por %p81, %p82
      %p84 = scmp.ne.s32.totalorder %s73, %s74
      %p85 = scmp.eq.s32.totalorder %s23, 0
      %p86 = por %p84, %p85
      %p87 = scmp.ne.s32.totalorder %s73, %s74
      %p88 = scmp.eq.s32.totalorder %s24, 1
      %p89 = por %p87, %p88
      %p91 = scmp.ne.s32.totalorder %s74, %s90
      %p92 = scmp.eq.s32.totalorder %s24, 0
      %p93 = por %p91, %p92
      %s95 = sadd.s32 %s94, 1
      %p98 = scmp.eq.s32.totalorder %s18, 1
      %p99 = scmp.ne.s32.totalorder %s94, %s96
      %p100 = scmp.eq.s32.totalorder %s18, 0
      %p101 = por %p99, %p100
      %p102 = scmp.ne.s32.totalorder %s94, %s96
      %p103 = scmp.eq.s32.totalorder %s23, 1
      %p104 = por %p102, %p103
      %p105 = scmp.ne.s32.totalorder %s96, %s97
      %p106 = scmp.eq.s32.totalorder %s23, 0
      %p107 = por %p105, %p106
      %p108 = scmp.ne.s32.totalorder %s96, %s97
      %p109 = scmp.eq.s32.totalorder %s24, 1
      %p110 = por %p108, %p109
      %p112 = scmp.ne.s32.totalorder %s97, %s111
      %p113 = scmp.eq.s32.totalorder %s24, 0
      %p114 = por %p112, %p113
      %s115 = ssub.s32 %s18, %s25
      %p116 = scmp.eq.s32.totalorder %s115, 0
      %s118 = sadd.s32 %s117, 1
      %s119 = scalar_select %p116, %s117, %s118
      %p122 = pneg %p116
      %p123 = scmp.eq.s32.totalorder %s18, 1
      %p124 = por %p122, %p123
      %p125 = scmp.ne.s32.totalorder %s117, %s120
      %p126 = scmp.eq.s32.totalorder %s18, 0
      %p127 = por %p125, %p126
      %p128 = scmp.ne.s32.totalorder %s117, %s120
      %p129 = scmp.eq.s32.totalorder %s23, 1
      %p130 = por %p128, %p129
      %p131 = scmp.ne.s32.totalorder %s120, %s121
      %p132 = scmp.eq.s32.totalorder %s23, 0
      %p133 = por %p131, %p132
      %p134 = scmp.ne.s32.totalorder %s120, %s121
      %p135 = scmp.eq.s32.totalorder %s24, 1
      %p136 = por %p134, %p135
      %p138 = scmp.ne.s32.totalorder %s121, %s137
      %p139 = scmp.eq.s32.totalorder %s24, 0
      %p140 = por %p138, %p139
      %s142 = sadd.s32 %s141, 1
      %p145 = scmp.eq.s32.totalorder %s18, 1
      %p146 = scmp.ne.s32.totalorder %s141, %s143
      %p147 = scmp.eq.s32.totalorder %s18, 0
      %p148 = por %p146, %p147
      %p149 = scmp.ne.s32.totalorder %s141, %s143
      %p150 = scmp.eq.s32.totalorder %s23, 1
      %p151 = por %p149, %p150
      %p152 = scmp.ne.s32.totalorder %s143, %s144
      %p153 = scmp.eq.s32.totalorder %s23, 0
      %p154 = por %p152, %p153
      %p155 = scmp.ne.s32.totalorder %s143, %s144
      %p156 = scmp.eq.s32.totalorder %s24, 1
      %p157 = por %p155, %p156
      %p159 = scmp.ne.s32.totalorder %s144, %s158
      %p160 = scmp.eq.s32.totalorder %s24, 0
      %p161 = por %p159, %p160
      %s162 = ssub.s32 %s18, %s25
      %p163 = scmp.eq.s32.totalorder %s162, 0
      %s165 = sadd.s32 %s164, 1
      %s166 = scalar_select %p163, %s164, %s165
      %p169 = pneg %p163
      %p170 = scmp.eq.s32.totalorder %s18, 1
      %p171 = por %p169, %p170
      %p172 = scmp.ne.s32.totalorder %s164, %s167
      %p173 = scmp.eq.s32.totalorder %s18, 0
      %p174 = por %p172, %p173
      %p175 = scmp.ne.s32.totalorder %s164, %s167
      %p176 = scmp.eq.s32.totalorder %s23, 1
      %p177 = por %p175, %p176
      %p178 = scmp.ne.s32.totalorder %s167, %s168
      %p179 = scmp.eq.s32.totalorder %s23, 0
      %p180 = por %p178, %p179
      %p181 = scmp.ne.s32.totalorder %s167, %s168
      %p182 = scmp.eq.s32.totalorder %s24, 1
      %p183 = por %p181, %p182
      %p185 = scmp.ne.s32.totalorder %s168, %s184
      %p186 = scmp.eq.s32.totalorder %s24, 0
      %p187 = por %p185, %p186
      %s189 = sadd.s32 %s188, 1
      %p192 = scmp.eq.s32.totalorder %s18, 1
      %p193 = scmp.ne.s32.totalorder %s188, %s190
      %p194 = scmp.eq.s32.totalorder %s18, 0
      %p195 = por %p193, %p194
      %p196 = scmp.ne.s32.totalorder %s188, %s190
      %p197 = scmp.eq.s32.totalorder %s23, 1
      %p198 = por %p196, %p197
      %p199 = scmp.ne.s32.totalorder %s190, %s191
      %p200 = scmp.eq.s32.totalorder %s23, 0
      %p201 = por %p199, %p200
      %p202 = scmp.ne.s32.totalorder %s190, %s191
      %p203 = scmp.eq.s32.totalorder %s24, 1
      %p204 = por %p202, %p203
      %p206 = scmp.ne.s32.totalorder %s191, %s205
      %p207 = scmp.eq.s32.totalorder %s24, 0
      %p208 = por %p206, %p207
      %s209 = ssub.s32 %s18, %s25
      %p210 = scmp.eq.s32.totalorder %s209, 0
      %s212 = sadd.s32 %s211, 1
      %s213 = scalar_select %p210, %s211, %s212
      %p216 = pneg %p210
      %p217 = scmp.eq.s32.totalorder %s18, 1
      %p218 = por %p216, %p217
      %p219 = scmp.ne.s32.totalorder %s211, %s214
      %p220 = scmp.eq.s32.totalorder %s18, 0
      %p221 = por %p219, %p220
      %p222 = scmp.ne.s32.totalorder %s211, %s214
      %p223 = scmp.eq.s32.totalorder %s23, 1
      %p224 = por %p222, %p223
      %p225 = scmp.ne.s32.totalorder %s214, %s215
      %p226 = scmp.eq.s32.totalorder %s23, 0
      %p227 = por %p225, %p226
      %p228 = scmp.ne.s32.totalorder %s214, %s215
      %p229 = scmp.eq.s32.totalorder %s24, 1
      %p230 = por %p228, %p229
      %p232 = scmp.ne.s32.totalorder %s215, %s231
      %p233 = scmp.eq.s32.totalorder %s24, 0
      %p234 = por %p232, %p233
      %s236 = sadd.s32 %s235, 1
      %p239 = scmp.eq.s32.totalorder %s18, 1
      %p240 = scmp.ne.s32.totalorder %s235, %s237
      %p241 = scmp.eq.s32.totalorder %s18, 0
      %p242 = por %p240, %p241
      %p243 = scmp.ne.s32.totalorder %s235, %s237
      %p244 = scmp.eq.s32.totalorder %s23, 1
      %p245 = por %p243, %p244
      %p246 = scmp.ne.s32.totalorder %s237, %s238
      %p247 = scmp.eq.s32.totalorder %s23, 0
      %p248 = por %p246, %p247
      %p249 = scmp.ne.s32.totalorder %s237, %s238
      %p250 = scmp.eq.s32.totalorder %s24, 1
      %p251 = por %p249, %p250
      %p253 = scmp.ne.s32.totalorder %s238, %s252
      %p254 = scmp.eq.s32.totalorder %s24, 0
      %p255 = por %p253, %p254
      %s257 = sadd.s32 %s256, 1
      %p260 = scmp.eq.s32.totalorder %s18, 1
      %p261 = scmp.ne.s32.totalorder %s256, %s258
      %p262 = scmp.eq.s32.totalorder %s18, 0
      %p263 = por %p261, %p262
      %p264 = scmp.ne.s32.totalorder %s256, %s258
      %p265 = scmp.eq.s32.totalorder %s23, 1
      %p266 = por %p264, %p265
      %p267 = scmp.ne.s32.totalorder %s258, %s259
      %p268 = scmp.eq.s32.totalorder %s23, 0
      %p269 = por %p267, %p268
      %p270 = scmp.ne.s32.totalorder %s258, %s259
      %p271 = scmp.eq.s32.totalorder %s24, 1
      %p272 = por %p270, %p271
      %p274 = scmp.ne.s32.totalorder %s259, %s273
      %p275 = scmp.eq.s32.totalorder %s24, 0
      %p276 = por %p274, %p275
      %s278 = sadd.s32 %s277, 1
      %p281 = scmp.eq.s32.totalorder %s18, 1
      %p282 = scmp.ne.s32.totalorder %s277, %s279
      %p283 = scmp.eq.s32.totalorder %s18, 0
      %p284 = por %p282, %p283
      %p285 = scmp.ne.s32.totalorder %s277, %s279
      %p286 = scmp.eq.s32.totalorder %s23, 1
      %p287 = por %p285, %p286
      %p288 = scmp.ne.s32.totalorder %s279, %s280
      %p289 = scmp.eq.s32.totalorder %s23, 0
      %p290 = por %p288, %p289
      %p291 = scmp.ne.s32.totalorder %s279, %s280
      %p292 = scmp.eq.s32.totalorder %s24, 1
      %p293 = por %p291, %p292
      %p295 = scmp.ne.s32.totalorder %s280, %s294
      %p296 = scmp.eq.s32.totalorder %s24, 0
      %p297 = por %p295, %p296
      %p298 = scmp.le.s32.totalorder 1, %s18
      %p299 = scmp.lt.s32.totalorder %s18, 3
      %p300 = pnand %p298, %p299
      %p301 = pneg %p300
      // Predicated region
      $region9: #{_lambda_.1} parent=5 // pred_check
        _
      $region10: #{_lambda_.1} parent=5 // pred_check_branch
        %303 = sbr.rel (%p300) target = $region12
      $region11: #{_lambda_.1} parent=5 // pred_region
        %s304 = ssub.s32 %s18, 1
        // Predicated region
        $region13: #{_lambda_.1} parent=11 // pred_check
          %p305 = pneg %p39
        $region14: #{_lambda_.1} parent=11 // pred_check_branch
          %307 = sbr.rel (%p305) target = $region16
        $region15: #{_lambda_.1} parent=11 // pred_region
          _
        $region16: #{_lambda_.1} parent=11 // pred_fallthru
          _
        // Predicated region
        $region17: #{_lambda_.1} parent=11 // pred_check
          %p308 = pneg %p60
        $region18: #{_lambda_.1} parent=11 // pred_check_branch
          %310 = sbr.rel (%p308) target = $region20
        $region19: #{_lambda_.1} parent=11 // pred_region
          _
        $region20: #{_lambda_.1} parent=11 // pred_fallthru
          _
        // Predicated region
        $region21: #{_lambda_.1} parent=11 // pred_check
          %p311 = pneg %p107
        $region22: #{_lambda_.1} parent=11 // pred_check_branch
          %313 = sbr.rel (%p311) target = $region24
        $region23: #{_lambda_.1} parent=11 // pred_region
          _
        $region24: #{_lambda_.1} parent=11 // pred_fallthru
          _
        // Predicated region
        $region25: #{_lambda_.1} parent=11 // pred_check
          %p314 = pneg %p154
        $region26: #{_lambda_.1} parent=11 // pred_check_branch
          %316 = sbr.rel (%p314) target = $region28
        $region27: #{_lambda_.1} parent=11 // pred_region
          _
        $region28: #{_lambda_.1} parent=11 // pred_fallthru
          _
        // Predicated region
        $region29: #{_lambda_.1} parent=11 // pred_check
          %p317 = pneg %p201
        $region30: #{_lambda_.1} parent=11 // pred_check_branch
          %319 = sbr.rel (%p317) target = $region32
        $region31: #{_lambda_.1} parent=11 // pred_region
          _
        $region32: #{_lambda_.1} parent=11 // pred_fallthru
          _
        // Predicated region
        $region33: #{_lambda_.1} parent=11 // pred_check
          %p320 = pneg %p248
        $region34: #{_lambda_.1} parent=11 // pred_check_branch
          %322 = sbr.rel (%p320) target = $region36
        $region35: #{_lambda_.1} parent=11 // pred_region
          _
        $region36: #{_lambda_.1} parent=11 // pred_fallthru
          _
        // Predicated region
        $region37: #{_lambda_.1} parent=11 // pred_check
          %p323 = pneg %p269
        $region38: #{_lambda_.1} parent=11 // pred_check_branch
          %325 = sbr.rel (%p323) target = $region40
        $region39: #{_lambda_.1} parent=11 // pred_region
          _
        $region40: #{_lambda_.1} parent=11 // pred_fallthru
          _
      $region12: #{_lambda_.1} parent=5 // pred_fallthru
        _
      %p326 = scmp.lt.s32.totalorder %s18, 2
      // Predicated region
      $region41: #{_lambda_.1} parent=5 // pred_check
        %p327 = pneg %p326
      $region42: #{_lambda_.1} parent=5 // pred_check_branch
        %329 = sbr.rel (%p327) target = $region44
      $region43: #{_lambda_.1} parent=5 // pred_region
        // Predicated region
        $region45: #{_lambda_.1} parent=43 // pred_check
          %p330 = pneg %p80
        $region46: #{_lambda_.1} parent=43 // pred_check_branch
          %332 = sbr.rel (%p330) target = $region48
        $region47: #{_lambda_.1} parent=43 // pred_region
          %s333 = smul.u32 4, %s18
          %p334 = scmp.lt.s32.totalorder %s333, 7
          %s335 = scalar_select %p334, %s333, 7
          %s336 = scalar_lea.vmem %s2, %s335
          %s337 = smul.u32 4, %s18
        $region48: #{_lambda_.1} parent=43 // pred_fallthru
          _
        // Predicated region
        $region49: #{_lambda_.1} parent=43 // pred_check
          %p338 = pneg %p127
        $region50: #{_lambda_.1} parent=43 // pred_check_branch
          %340 = sbr.rel (%p338) target = $region52
        $region51: #{_lambda_.1} parent=43 // pred_region
          %s341 = sand.u32 %s117, 1
          %s342 = sand.u32 %s117, 1
          %s343 = smul.addr %s342, 256
          %s344 = scalar_lea.vmem [#allocation5], %s343
          %s345 = smul.u32 4, %s18
          %s346 = smul.addr %s345, 8
          %s347 = scalar_lea.vmem %s4, %s346
          // Predicated region
          $region53: #{_lambda_.1} parent=51 // pred_check
            _
          $region54: #{_lambda_.1} parent=51 // pred_check_branch
            %349 = sbr.rel (0) target = $region56
          $region55: #{_lambda_.1} parent=51 // pred_region
            // Predicated region
            $region57: #{_lambda_.1} parent=55 // pred_check
              _
            $region58: #{_lambda_.1} parent=55 // pred_check_branch
              %351 = sbr.rel (0) target = $region60
            $region59: #{_lambda_.1} parent=55 // pred_region
              loop: start=0, step=1, limit=1
              $region61: #{_lambda_.1} parent=59 // loop_pre_header
                _
              $region62: #{_lambda_.1} parent=59 // loop_header
                %s353 = sphi 0, %s357
                %p354 = scmp.ge.s32.totalorder %s353, 1
                %s358 = sphi %s347, %s347
                %s359 = sphi %s344, %s344
              $region63: #{_lambda_.1} parent=59 // loop_header_branch
                %356 = sbr.rel (%p354) target = $region67
              $region64: #{_lambda_.1} parent=59 // loop_body
                %v360 = vld [vmem:[%s358] sm:$0xff]
                %361 = vst [vmem:[%s359] sm:$0xff] %v360
                %v362 = vld [vmem:[%s358 + $0x8] sm:$0xff]
                %363 = vst [vmem:[%s359 + $0x8] sm:$0xff] %v362
                %v364 = vld [vmem:[%s358 + $0x10] sm:$0xff]
                %365 = vst [vmem:[%s359 + $0x10] sm:$0xff] %v364
                %v366 = vld [vmem:[%s358 + $0x18] sm:$0xff]
                %367 = vst [vmem:[%s359 + $0x18] sm:$0xff] %v366
                %v368 = vld [vmem:[%s358 + $0x40] sm:$0xff]
                %369 = vst [vmem:[%s359 + $0x20] sm:$0xff] %v368
                %v370 = vld [vmem:[%s358 + $0x48] sm:$0xff]
                %371 = vst [vmem:[%s359 + $0x28] sm:$0xff] %v370
                %v372 = vld [vmem:[%s358 + $0x50] sm:$0xff]
                %373 = vst [vmem:[%s359 + $0x30] sm:$0xff] %v372
                %v374 = vld [vmem:[%s358 + $0x58] sm:$0xff]
                %375 = vst [vmem:[%s359 + $0x38] sm:$0xff] %v374
                %v376 = vld [vmem:[%s358 + $0x80] sm:$0xff]
                %377 = vst [vmem:[%s359 + $0x40] sm:$0xff] %v376
                %v378 = vld [vmem:[%s358 + $0x88] sm:$0xff]
                %379 = vst [vmem:[%s359 + $0x48] sm:$0xff] %v378
                %v380 = vld [vmem:[%s358 + $0x90] sm:$0xff]
                %381 = vst [vmem:[%s359 + $0x50] sm:$0xff] %v380
                %v382 = vld [vmem:[%s358 + $0x98] sm:$0xff]
                %383 = vst [vmem:[%s359 + $0x58] sm:$0xff] %v382
                %v384 = vld [vmem:[%s358 + $0xc0] sm:$0xff]
                %385 = vst [vmem:[%s359 + $0x60] sm:$0xff] %v384
                %v386 = vld [vmem:[%s358 + $0xc8] sm:$0xff]
                %387 = vst [vmem:[%s359 + $0x68] sm:$0xff] %v386
                %v388 = vld [vmem:[%s358 + $0xd0] sm:$0xff]
                %389 = vst [vmem:[%s359 + $0x70] sm:$0xff] %v388
                %v390 = vld [vmem:[%s358 + $0xd8] sm:$0xff]
                %391 = vst [vmem:[%s359 + $0x78] sm:$0xff] %v390
                %v392 = vld [vmem:[%s358 + $0x100] sm:$0xff]
                %393 = vst [vmem:[%s359 + $0x80] sm:$0xff] %v392
                %v394 = vld [vmem:[%s358 + $0x108] sm:$0xff]
                %395 = vst [vmem:[%s359 + $0x88] sm:$0xff] %v394
                %v396 = vld [vmem:[%s358 + $0x110] sm:$0xff]
                %397 = vst [vmem:[%s359 + $0x90] sm:$0xff] %v396
                %v398 = vld [vmem:[%s358 + $0x118] sm:$0xff]
                %399 = vst [vmem:[%s359 + $0x98] sm:$0xff] %v398
                %v400 = vld [vmem:[%s358 + $0x140] sm:$0xff]
                %401 = vst [vmem:[%s359 + $0xa0] sm:$0xff] %v400
                %v402 = vld [vmem:[%s358 + $0x148] sm:$0xff]
                %403 = vst [vmem:[%s359 + $0xa8] sm:$0xff] %v402
                %v404 = vld [vmem:[%s358 + $0x150] sm:$0xff]
                %405 = vst [vmem:[%s359 + $0xb0] sm:$0xff] %v404
                %v406 = vld [vmem:[%s358 + $0x158] sm:$0xff]
                %407 = vst [vmem:[%s359 + $0xb8] sm:$0xff] %v406
                %v408 = vld [vmem:[%s358 + $0x180] sm:$0xff]
                %409 = vst [vmem:[%s359 + $0xc0] sm:$0xff] %v408
                %v410 = vld [vmem:[%s358 + $0x188] sm:$0xff]
                %411 = vst [vmem:[%s359 + $0xc8] sm:$0xff] %v410
                %v412 = vld [vmem:[%s358 + $0x190] sm:$0xff]
                %413 = vst [vmem:[%s359 + $0xd0] sm:$0xff] %v412
                %v414 = vld [vmem:[%s358 + $0x198] sm:$0xff]
                %415 = vst [vmem:[%s359 + $0xd8] sm:$0xff] %v414
                %v416 = vld [vmem:[%s358 + $0x1c0] sm:$0xff]
                %417 = vst [vmem:[%s359 + $0xe0] sm:$0xff] %v416
                %v418 = vld [vmem:[%s358 + $0x1c8] sm:$0xff]
                %419 = vst [vmem:[%s359 + $0xe8] sm:$0xff] %v418
                %v420 = vld [vmem:[%s358 + $0x1d0] sm:$0xff]
                %421 = vst [vmem:[%s359 + $0xf0] sm:$0xff] %v420
                %v422 = vld [vmem:[%s358 + $0x1d8] sm:$0xff]
                %423 = vst [vmem:[%s359 + $0xf8] sm:$0xff] %v422
              $region65: #{_lambda_.1} parent=59 // loop_footer
                %s357 = sadd.s32 1, %s353
              $region66: #{_lambda_.1} parent=59 // loop_footer_branch
                %352 = sbr.rel target = $region62
              $region67: #{_lambda_.1} parent=59 // loop_exit
                _
            $region60: #{_lambda_.1} parent=55 // pred_fallthru
              _
            // Predicated region
            $region68: #{_lambda_.1} parent=55 // pred_check
              _
            $region69: #{_lambda_.1} parent=55 // pred_check_branch
              %425 = sbr.rel target = $region71
            $region70: #{_lambda_.1} parent=55 // pred_region
              _
            $region71: #{_lambda_.1} parent=55 // pred_fallthru
              _
          $region56: #{_lambda_.1} parent=51 // pred_fallthru
            _
          %426 = vnop
        $region52: #{_lambda_.1} parent=43 // pred_fallthru
          _
        // Predicated region
        $region72: #{_lambda_.1} parent=43 // pred_check
          %p427 = pneg %p174
        $region73: #{_lambda_.1} parent=43 // pred_check_branch
          %429 = sbr.rel (%p427) target = $region75
        $region74: #{_lambda_.1} parent=43 // pred_region
          %s430 = smul.u32 64, %s18
          %p431 = scmp.lt.s32.totalorder %s430, 127
          %s432 = scalar_select %p431, %s430, 127
          %s433 = smul.addr %s432, 2
          %s434 = smul.addr %s433, 4
          %s435 = scalar_lea.vmem %s6, %s434
          %s436 = smul.u32 64, %s18
        $region75: #{_lambda_.1} parent=43 // pred_fallthru
          _
        // Predicated region
        $region76: #{_lambda_.1} parent=43 // pred_check
          %p437 = pneg %p221
        $region77: #{_lambda_.1} parent=43 // pred_check_branch
          %439 = sbr.rel (%p437) target = $region79
        $region78: #{_lambda_.1} parent=43 // pred_region
          %s440 = smul.u32 64, %s18
          %p441 = scmp.lt.s32.totalorder %s440, 127
          %s442 = scalar_select %p441, %s440, 127
          %s443 = smul.addr %s442, 2
          %s444 = smul.addr %s443, 4
          %s445 = scalar_lea.vmem %s8, %s444
          %s446 = smul.u32 64, %s18
        $region79: #{_lambda_.1} parent=43 // pred_fallthru
          _
      $region44: #{_lambda_.1} parent=5 // pred_fallthru
        _
      %p447 = scmp.le.s32.totalorder 1, %s18
      %p448 = scmp.lt.s32.totalorder %s18, 3
      %p449 = pnand %p447, %p448
      %p450 = pneg %p449
      // Predicated region
      $region80: #{_lambda_.1} parent=5 // pred_check
        _
      $region81: #{_lambda_.1} parent=5 // pred_check_branch
        %452 = sbr.rel (%p449) target = $region83
      $region82: #{_lambda_.1} parent=5 // pred_region
        %s453 = ssub.s32 %s18, 1
        %s454 = sand.u32 %s120, 1
        %s455 = sand.u32 %s120, 1
        %s456 = smul.addr %s455, 256
        %s457 = scalar_lea.vmem [#allocation5], %s456
        // Predicated region
        $region84: #{_lambda_.1} parent=82 // pred_check
          %p458 = pneg %p133
        $region85: #{_lambda_.1} parent=82 // pred_check_branch
          %460 = sbr.rel (%p458) target = $region87
        $region86: #{_lambda_.1} parent=82 // pred_region
          _
        $region87: #{_lambda_.1} parent=82 // pred_fallthru
          _
        %p461 = pneg %p39
        %p462 = pneg %p36
        %p463 = pneg %p60
        %p464 = pneg %p57
        %s465 = smul.u32 4, %s23
        %p466 = scmp.lt.s32.totalorder %s465, 7
        %s467 = scalar_select %p466, %s465, 7
        %s468 = scalar_lea.vmem %s2, %s467
        %p469 = pneg %p86
        %p470 = pneg %p83
        %p471 = pneg %p107
        %p472 = pneg %p104
        %s473 = sand.u32 %s120, 1
        %s474 = sand.u32 %s120, 1
        %s475 = smul.addr %s474, 256
        %s476 = scalar_lea.vmem [#allocation5], %s475
        %p477 = pneg %p133
        %p478 = pneg %p130
        %p479 = pneg %p154
        %p480 = pneg %p151
        %s481 = smul.u32 64, %s23
        %p482 = scmp.lt.s32.totalorder %s481, 127
        %s483 = scalar_select %p482, %s481, 127
        %s484 = smul.addr %s483, 2
        %s485 = smul.addr %s484, 4
        %s486 = scalar_lea.vmem %s6, %s485
        %p487 = pneg %p180
        %p488 = pneg %p177
        %p489 = pneg %p201
        %p490 = pneg %p198
        %s491 = smul.u32 64, %s23
        %p492 = scmp.lt.s32.totalorder %s491, 127
        %s493 = scalar_select %p492, %s491, 127
        %s494 = smul.addr %s493, 2
        %s495 = smul.addr %s494, 4
        %s496 = scalar_lea.vmem %s8, %s495
        %p497 = pneg %p227
        %p498 = pneg %p224
        %p499 = pneg %p248
        %p500 = pneg %p245
        %p501 = pneg %p269
        %p502 = pneg %p266
        %p503 = pneg %p290
        %p504 = pneg %p287
        %s505 = smul.u32 4, %s23
        %p506 = scmp.lt.s32.totalorder %s505, 7
        %s507 = scalar_select %p506, %s505, 7
        %s508 = scalar_lea.vmem %s2, %s507
        %s509 = smul.u32 4, %s23
        %s510 = smul.u32 4, %s23
        %s511 = smul.u32 64, %s23
        %p512 = scmp.lt.s32.totalorder %s511, 127
        %s513 = scalar_select %p512, %s511, 127
        %s514 = smul.addr %s513, 2
        %s515 = smul.addr %s514, 4
        %s516 = scalar_lea.vmem %s6, %s515
        %s517 = smul.u32 64, %s23
        %s518 = smul.u32 64, %s23
        %p519 = scmp.lt.s32.totalorder %s518, 127
        %s520 = scalar_select %p519, %s518, 127
        %s521 = smul.addr %s520, 2
        %s522 = smul.addr %s521, 4
        %s523 = scalar_lea.vmem %s8, %s522
        %s524 = smul.u32 64, %s23
        %p526 = scmp.eq.s32.totalorder %s23, 0
        // Predicated region
        $region88: #{_lambda_.1} parent=82 // pred_check
          %p527 = pneg %p526
        $region89: #{_lambda_.1} parent=82 // pred_check_branch
          %529 = sbr.rel (%p527) target = $region91
        $region90: #{_lambda_.1} parent=82 // pred_region
          %530 = vst [vmem:[#allocation2] sm:$0xf] 0.0
          %531 = vst [vmem:[#allocation3] sm:$0xf] 0.0
        $region91: #{_lambda_.1} parent=82 // pred_fallthru
          _
        %v532 = vld [vmem:[%s457] sm:$0xff]
        %v533 = vld [vmem:[%s457 + $0x8] sm:$0xff]
        %v534 = vld [vmem:[%s457 + $0x10] sm:$0xff]
        %v535 = vld [vmem:[%s457 + $0x18] sm:$0xff]
        %v536 = vld [vmem:[%s457 + $0x20] sm:$0xff]
        %v537 = vld [vmem:[%s457 + $0x28] sm:$0xff]
        %v538 = vld [vmem:[%s457 + $0x30] sm:$0xff]
        %v539 = vld [vmem:[%s457 + $0x38] sm:$0xff]
        %v540 = vld [vmem:[%s457 + $0x40] sm:$0xff]
        %v541 = vld [vmem:[%s457 + $0x48] sm:$0xff]
        %v542 = vld [vmem:[%s457 + $0x50] sm:$0xff]
        %v543 = vld [vmem:[%s457 + $0x58] sm:$0xff]
        %v544 = vld [vmem:[%s457 + $0x60] sm:$0x1]
        %v545 = vld [vmem:[%s457 + $0x68] sm:$0x1]
        %v546 = vld [vmem:[%s457 + $0x70] sm:$0x1]
        %v547 = vld [vmem:[%s457 + $0x78] sm:$0x1]
        %v548 = vld [vmem:[%s457 + $0x80] sm:$0xff]
        %v549 = vld [vmem:[%s457 + $0x88] sm:$0xff]
        %v550 = vld [vmem:[%s457 + $0x90] sm:$0xff]
        %v551 = vld [vmem:[%s457 + $0x98] sm:$0xff]
        %v552 = vld [vmem:[%s457 + $0xa0] sm:$0xff]
        %v553 = vld [vmem:[%s457 + $0xa8] sm:$0xff]
        %v554 = vld [vmem:[%s457 + $0xb0] sm:$0xff]
        %v555 = vld [vmem:[%s457 + $0xb8] sm:$0xff]
        %v556 = vld [vmem:[%s457 + $0xc0] sm:$0xff]
        %v557 = vld [vmem:[%s457 + $0xc8] sm:$0xff]
        %v558 = vld [vmem:[%s457 + $0xd0] sm:$0xff]
        %v559 = vld [vmem:[%s457 + $0xd8] sm:$0xff]
        %v560 = vld [vmem:[%s457 + $0xe0] sm:$0x1]
        %v561 = vld [vmem:[%s457 + $0xe8] sm:$0x1]
        %v562 = vld [vmem:[%s457 + $0xf0] sm:$0x1]
        %v563 = vld [vmem:[%s457 + $0xf8] sm:$0x1]
        %v564 = vld [vmem:[%s1] sm:$0xff]
        %v565 = vld [vmem:[%s1 + $0x8] sm:$0xff]
        %v566 = vld [vmem:[%s1 + $0x10] sm:$0xff]
        %v567 = vld [vmem:[%s1 + $0x18] sm:$0x1]
        %569 = vset.pattern.permute.xlu0 0
        %570 = vperm.xlu0 %569, %v564
        %v571 = vpop.permute.xlu0 %570
        %574 = vset.pattern.permute.xlu0 0
        %575 = vperm.xlu0 %574, %v565
        %v576 = vpop.permute.xlu0 %575
        %579 = vset.pattern.permute.xlu0 0
        %580 = vperm.xlu0 %579, %v566
        %v581 = vpop.permute.xlu0 %580
        %584 = vset.pattern.permute.xlu0 0
        %585 = vperm.xlu0 %584, %v567
        %v586 = vpop.permute.xlu0 %585
        %v588 = vmul.f32 %v532, %v571
        %v589 = vmul.f32 %v533, %v571
        %v590 = vmul.f32 %v534, %v571
        %v591 = vmul.f32 %v535, %v571
        %v592 = vmul.f32 %v536, %v576
        %v593 = vmul.f32 %v537, %v576
        %v594 = vmul.f32 %v538, %v576
        %v595 = vmul.f32 %v539, %v576
        %v596 = vmul.f32 %v540, %v581
        %v597 = vmul.f32 %v541, %v581
        %v598 = vmul.f32 %v542, %v581
        %v599 = vmul.f32 %v543, %v581
        %v600 = vmul.f32 %v544, %v586
        %v601 = vmul.f32 %v545, %v586
        %v602 = vmul.f32 %v546, %v586
        %v603 = vmul.f32 %v547, %v586
        %v604 = vmul.f32 %v548, %v571
        %v605 = vmul.f32 %v549, %v571
        %v606 = vmul.f32 %v550, %v571
        %v607 = vmul.f32 %v551, %v571
        %v608 = vmul.f32 %v552, %v576
        %v609 = vmul.f32 %v553, %v576
        %v610 = vmul.f32 %v554, %v576
        %v611 = vmul.f32 %v555, %v576
        %v612 = vmul.f32 %v556, %v581
        %v613 = vmul.f32 %v557, %v581
        %v614 = vmul.f32 %v558, %v581
        %v615 = vmul.f32 %v559, %v581
        %v616 = vmul.f32 %v560, %v586
        %v617 = vmul.f32 %v561, %v586
        %v618 = vmul.f32 %v562, %v586
        %v619 = vmul.f32 %v563, %v586
        %v620 = vadd.f32 %v588, %v592
        %v621 = vadd.f32 %v620, %v596
        %vm622 = vcmask 1040384
        %v623 = vsel %vm622, %v600, 0.0
        %v624 = vadd.f32 %v621, %v623
        %v625 = vrot.slane %v624, 4
        %v626 = vadd.f32 %v624, %v625
        %v627 = vrot.slane %v626, 2
        %v628 = vadd.f32 %v626, %v627
        %v629 = vrot.slane %v628, 1
        %v630 = vadd.f32 %v628, %v629
        %v631 = vadd.f32 %v589, %v593
        %v632 = vadd.f32 %v631, %v597
        %v633 = vsel %vm622, %v601, 0.0
        %v634 = vadd.f32 %v632, %v633
        %v635 = vrot.slane %v634, 4
        %v636 = vadd.f32 %v634, %v635
        %v637 = vrot.slane %v636, 2
        %v638 = vadd.f32 %v636, %v637
        %v639 = vrot.slane %v638, 1
        %v640 = vadd.f32 %v638, %v639
        %v641 = vadd.f32 %v590, %v594
        %v642 = vadd.f32 %v641, %v598
        %v643 = vsel %vm622, %v602, 0.0
        %v644 = vadd.f32 %v642, %v643
        %v645 = vrot.slane %v644, 4
        %v646 = vadd.f32 %v644, %v645
        %v647 = vrot.slane %v646, 2
        %v648 = vadd.f32 %v646, %v647
        %v649 = vrot.slane %v648, 1
        %v650 = vadd.f32 %v648, %v649
        %v651 = vadd.f32 %v591, %v595
        %v652 = vadd.f32 %v651, %v599
        %v653 = vsel %vm622, %v603, 0.0
        %v654 = vadd.f32 %v652, %v653
        %v655 = vrot.slane %v654, 4
        %v656 = vadd.f32 %v654, %v655
        %v657 = vrot.slane %v656, 2
        %v658 = vadd.f32 %v656, %v657
        %v659 = vrot.slane %v658, 1
        %v660 = vadd.f32 %v658, %v659
        %v661 = vadd.f32 %v604, %v608
        %v662 = vadd.f32 %v661, %v612
        %v663 = vsel %vm622, %v616, 0.0
        %v664 = vadd.f32 %v662, %v663
        %v665 = vrot.slane %v664, 4
        %v666 = vadd.f32 %v664, %v665
        %v667 = vrot.slane %v666, 2
        %v668 = vadd.f32 %v666, %v667
        %v669 = vrot.slane %v668, 1
        %v670 = vadd.f32 %v668, %v669
        %v671 = vadd.f32 %v605, %v609
        %v672 = vadd.f32 %v671, %v613
        %v673 = vsel %vm622, %v617, 0.0
        %v674 = vadd.f32 %v672, %v673
        %v675 = vrot.slane %v674, 4
        %v676 = vadd.f32 %v674, %v675
        %v677 = vrot.slane %v676, 2
        %v678 = vadd.f32 %v676, %v677
        %v679 = vrot.slane %v678, 1
        %v680 = vadd.f32 %v678, %v679
        %v681 = vadd.f32 %v606, %v610
        %v682 = vadd.f32 %v681, %v614
        %v683 = vsel %vm622, %v618, 0.0
        %v684 = vadd.f32 %v682, %v683
        %v685 = vrot.slane %v684, 4
        %v686 = vadd.f32 %v684, %v685
        %v687 = vrot.slane %v686, 2
        %v688 = vadd.f32 %v686, %v687
        %v689 = vrot.slane %v688, 1
        %v690 = vadd.f32 %v688, %v689
        %v691 = vadd.f32 %v607, %v611
        %v692 = vadd.f32 %v691, %v615
        %v693 = vsel %vm622, %v619, 0.0
        %v694 = vadd.f32 %v692, %v693
        %v695 = vrot.slane %v694, 4
        %v696 = vadd.f32 %v694, %v695
        %v697 = vrot.slane %v696, 2
        %v698 = vadd.f32 %v696, %v697
        %v699 = vrot.slane %v698, 1
        %v700 = vadd.f32 %v698, %v699
        %s701 = sld [smem:[#allocation4]]
        %v702 = vstv %s701
        %v703 = vadd.f32 %v630, %v702
        %v704 = vadd.f32 %v640, %v702
        %v705 = vadd.f32 %v650, %v702
        %v706 = vadd.f32 %v660, %v702
        %v707 = vadd.f32 %v670, %v702
        %v708 = vadd.f32 %v680, %v702
        %v709 = vadd.f32 %v690, %v702
        %v710 = vadd.f32 %v700, %v702
        %v711 = vld [vmem:[#allocation2] sm:$0xf]
        %v712 = vld [vmem:[%s508] sm:$0xf]
        %v713 = vld [vmem:[%s516] sm:$0xff]
        %v714 = vld [vmem:[%s516 + $0x8] sm:$0xff]
        %v715 = vld [vmem:[%s516 + $0x10] sm:$0xff]
        %v716 = vld [vmem:[%s516 + $0x18] sm:$0xff]
        %v717 = vld [vmem:[%s516 + $0x20] sm:$0xff]
        %v718 = vld [vmem:[%s516 + $0x28] sm:$0xff]
        %v719 = vld [vmem:[%s516 + $0x30] sm:$0xff]
        %v720 = vld [vmem:[%s516 + $0x38] sm:$0xff]
        %v721 = vld [vmem:[%s516 + $0x40] sm:$0xff]
        %v722 = vld [vmem:[%s516 + $0x48] sm:$0xff]
        %v723 = vld [vmem:[%s516 + $0x50] sm:$0xff]
        %v724 = vld [vmem:[%s516 + $0x58] sm:$0xff]
        %v725 = vld [vmem:[%s516 + $0x60] sm:$0xff]
        %v726 = vld [vmem:[%s516 + $0x68] sm:$0xff]
        %v727 = vld [vmem:[%s516 + $0x70] sm:$0xff]
        %v728 = vld [vmem:[%s516 + $0x78] sm:$0xff]
        %v729 = vld [vmem:[%s516 + $0x80] sm:$0xff]
        %v730 = vld [vmem:[%s516 + $0x88] sm:$0xff]
        %v731 = vld [vmem:[%s516 + $0x90] sm:$0xff]
        %v732 = vld [vmem:[%s516 + $0x98] sm:$0xff]
        %v733 = vld [vmem:[%s516 + $0xa0] sm:$0xff]
        %v734 = vld [vmem:[%s516 + $0xa8] sm:$0xff]
        %v735 = vld [vmem:[%s516 + $0xb0] sm:$0xff]
        %v736 = vld [vmem:[%s516 + $0xb8] sm:$0xff]
        %v737 = vld [vmem:[%s516 + $0xc0] sm:$0xff]
        %v738 = vld [vmem:[%s516 + $0xc8] sm:$0xff]
        %v739 = vld [vmem:[%s516 + $0xd0] sm:$0xff]
        %v740 = vld [vmem:[%s516 + $0xd8] sm:$0xff]
        %v741 = vld [vmem:[%s516 + $0xe0] sm:$0xff]
        %v742 = vld [vmem:[%s516 + $0xe8] sm:$0xff]
        %v743 = vld [vmem:[%s516 + $0xf0] sm:$0xff]
        %v744 = vld [vmem:[%s516 + $0xf8] sm:$0xff]
        %v745 = vld [vmem:[%s516 + $0x100] sm:$0xff]
        %v746 = vld [vmem:[%s516 + $0x108] sm:$0xff]
        %v747 = vld [vmem:[%s516 + $0x110] sm:$0xff]
        %v748 = vld [vmem:[%s516 + $0x118] sm:$0xff]
        %v749 = vld [vmem:[%s516 + $0x120] sm:$0xff]
        %v750 = vld [vmem:[%s516 + $0x128] sm:$0xff]
        %v751 = vld [vmem:[%s516 + $0x130] sm:$0xff]
        %v752 = vld [vmem:[%s516 + $0x138] sm:$0xff]
        %v753 = vld [vmem:[%s516 + $0x140] sm:$0xff]
        %v754 = vld [vmem:[%s516 + $0x148] sm:$0xff]
        %v755 = vld [vmem:[%s516 + $0x150] sm:$0xff]
        %v756 = vld [vmem:[%s516 + $0x158] sm:$0xff]
        %v757 = vld [vmem:[%s516 + $0x160] sm:$0xff]
        %v758 = vld [vmem:[%s516 + $0x168] sm:$0xff]
        %v759 = vld [vmem:[%s516 + $0x170] sm:$0xff]
        %v760 = vld [vmem:[%s516 + $0x178] sm:$0xff]
        %v761 = vld [vmem:[%s516 + $0x180] sm:$0xff]
        %v762 = vld [vmem:[%s516 + $0x188] sm:$0xff]
        %v763 = vld [vmem:[%s516 + $0x190] sm:$0xff]
        %v764 = vld [vmem:[%s516 + $0x198] sm:$0xff]
        %v765 = vld [vmem:[%s516 + $0x1a0] sm:$0xff]
        %v766 = vld [vmem:[%s516 + $0x1a8] sm:$0xff]
        %v767 = vld [vmem:[%s516 + $0x1b0] sm:$0xff]
        %v768 = vld [vmem:[%s516 + $0x1b8] sm:$0xff]
        %v769 = vld [vmem:[%s516 + $0x1c0] sm:$0xff]
        %v770 = vld [vmem:[%s516 + $0x1c8] sm:$0xff]
        %v771 = vld [vmem:[%s516 + $0x1d0] sm:$0xff]
        %v772 = vld [vmem:[%s516 + $0x1d8] sm:$0xff]
        %v773 = vld [vmem:[%s516 + $0x1e0] sm:$0xff]
        %v774 = vld [vmem:[%s516 + $0x1e8] sm:$0xff]
        %v775 = vld [vmem:[%s516 + $0x1f0] sm:$0xff]
        %v776 = vld [vmem:[%s516 + $0x1f8] sm:$0xff]
        %v779 = vunpack.c.l.s4 1966171168
        %v780 = vunpack.c.0.s8 %v779
        %v781 = vlaneseq
        %v782 = vshrl.u32 %v781, 7
        %v783 = vsub.s32 %v780, %v782
        %v784 = vrot.slane %v712, %v783
        %v785 = vcombine.high %v784, %v784
        %v787 = vunpack.c.l.s4 1966171168
        %v788 = vunpack.c.0.s8 %v787
        %v789 = vlaneseq
        %v790 = vshrl.u32 %v789, 7
        %v791 = vsub.s32 %v788, %v790
        %v792 = vrot.slane %v784, %v791
        %v794 = vunpack.c.l.s4 1966171168
        %v795 = vunpack.c.0.s8 %v794
        %v796 = vlaneseq
        %v797 = vshrl.u32 %v796, 7
        %v798 = vsub.s32 %v795, %v797
        %v799 = vrot.slane %v785, %v798
        %v800 = vcombine.high %v792, %v792
        %v801 = vcombine.high %v799, %v799
        %v870 = vunpack.c.l.b16 %v713
        %v871 = vunpack.c.h.b16 %v713
        %v872 = vunpack.c.l.b16 %v714
        %v873 = vunpack.c.h.b16 %v714
        %v874 = vunpack.c.l.b16 %v715
        %v875 = vunpack.c.h.b16 %v715
        %v876 = vunpack.c.l.b16 %v716
        %v877 = vunpack.c.h.b16 %v716
        %v878 = vunpack.c.l.b16 %v717
        %v879 = vunpack.c.h.b16 %v717
        %v880 = vunpack.c.l.b16 %v718
        %v881 = vunpack.c.h.b16 %v718
        %v882 = vunpack.c.l.b16 %v719
        %v883 = vunpack.c.h.b16 %v719
        %v884 = vunpack.c.l.b16 %v720
        %v885 = vunpack.c.h.b16 %v720
        %v886 = vunpack.c.l.b16 %v721
        %v887 = vunpack.c.h.b16 %v721
        %v888 = vunpack.c.l.b16 %v722
        %v889 = vunpack.c.h.b16 %v722
        %v890 = vunpack.c.l.b16 %v723
        %v891 = vunpack.c.h.b16 %v723
        %v892 = vunpack.c.l.b16 %v724
        %v893 = vunpack.c.h.b16 %v724
        %v894 = vunpack.c.l.b16 %v725
        %v895 = vunpack.c.h.b16 %v725
        %v896 = vunpack.c.l.b16 %v726
        %v897 = vunpack.c.h.b16 %v726
        %v898 = vunpack.c.l.b16 %v727
        %v899 = vunpack.c.h.b16 %v727
        %v900 = vunpack.c.l.b16 %v728
        %v901 = vunpack.c.h.b16 %v728
        %v902 = vunpack.c.l.b16 %v729
        %v903 = vunpack.c.h.b16 %v729
        %v904 = vunpack.c.l.b16 %v730
        %v905 = vunpack.c.h.b16 %v730
        %v906 = vunpack.c.l.b16 %v731
        %v907 = vunpack.c.h.b16 %v731
        %v908 = vunpack.c.l.b16 %v732
        %v909 = vunpack.c.h.b16 %v732
        %v910 = vunpack.c.l.b16 %v733
        %v911 = vunpack.c.h.b16 %v733
        %v912 = vunpack.c.l.b16 %v734
        %v913 = vunpack.c.h.b16 %v734
        %v914 = vunpack.c.l.b16 %v735
        %v915 = vunpack.c.h.b16 %v735
        %v916 = vunpack.c.l.b16 %v736
        %v917 = vunpack.c.h.b16 %v736
        %v918 = vunpack.c.l.b16 %v737
        %v919 = vunpack.c.h.b16 %v737
        %v920 = vunpack.c.l.b16 %v738
        %v921 = vunpack.c.h.b16 %v738
        %v922 = vunpack.c.l.b16 %v739
        %v923 = vunpack.c.h.b16 %v739
        %v924 = vunpack.c.l.b16 %v740
        %v925 = vunpack.c.h.b16 %v740
        %v926 = vunpack.c.l.b16 %v741
        %v927 = vunpack.c.h.b16 %v741
        %v928 = vunpack.c.l.b16 %v742
        %v929 = vunpack.c.h.b16 %v742
        %v930 = vunpack.c.l.b16 %v743
        %v931 = vunpack.c.h.b16 %v743
        %v932 = vunpack.c.l.b16 %v744
        %v933 = vunpack.c.h.b16 %v744
        %v934 = vunpack.c.l.b16 %v745
        %v935 = vunpack.c.h.b16 %v745
        %v936 = vunpack.c.l.b16 %v746
        %v937 = vunpack.c.h.b16 %v746
        %v938 = vunpack.c.l.b16 %v747
        %v939 = vunpack.c.h.b16 %v747
        %v940 = vunpack.c.l.b16 %v748
        %v941 = vunpack.c.h.b16 %v748
        %v942 = vunpack.c.l.b16 %v749
        %v943 = vunpack.c.h.b16 %v749
        %v944 = vunpack.c.l.b16 %v750
        %v945 = vunpack.c.h.b16 %v750
        %v946 = vunpack.c.l.b16 %v751
        %v947 = vunpack.c.h.b16 %v751
        %v948 = vunpack.c.l.b16 %v752
        %v949 = vunpack.c.h.b16 %v752
        %v950 = vunpack.c.l.b16 %v753
        %v951 = vunpack.c.h.b16 %v753
        %v952 = vunpack.c.l.b16 %v754
        %v953 = vunpack.c.h.b16 %v754
        %v954 = vunpack.c.l.b16 %v755
        %v955 = vunpack.c.h.b16 %v755
        %v956 = vunpack.c.l.b16 %v756
        %v957 = vunpack.c.h.b16 %v756
        %v958 = vunpack.c.l.b16 %v757
        %v959 = vunpack.c.h.b16 %v757
        %v960 = vunpack.c.l.b16 %v758
        %v961 = vunpack.c.h.b16 %v758
        %v962 = vunpack.c.l.b16 %v759
        %v963 = vunpack.c.h.b16 %v759
        %v964 = vunpack.c.l.b16 %v760
        %v965 = vunpack.c.h.b16 %v760
        %v966 = vunpack.c.l.b16 %v761
        %v967 = vunpack.c.h.b16 %v761
        %v968 = vunpack.c.l.b16 %v762
        %v969 = vunpack.c.h.b16 %v762
        %v970 = vunpack.c.l.b16 %v763
        %v971 = vunpack.c.h.b16 %v763
        %v972 = vunpack.c.l.b16 %v764
        %v973 = vunpack.c.h.b16 %v764
        %v974 = vunpack.c.l.b16 %v765
        %v975 = vunpack.c.h.b16 %v765
        %v976 = vunpack.c.l.b16 %v766
        %v977 = vunpack.c.h.b16 %v766
        %v978 = vunpack.c.l.b16 %v767
        %v979 = vunpack.c.h.b16 %v767
        %v980 = vunpack.c.l.b16 %v768
        %v981 = vunpack.c.h.b16 %v768
        %v982 = vunpack.c.l.b16 %v769
        %v983 = vunpack.c.h.b16 %v769
        %v984 = vunpack.c.l.b16 %v770
        %v985 = vunpack.c.h.b16 %v770
        %v986 = vunpack.c.l.b16 %v771
        %v987 = vunpack.c.h.b16 %v771
        %v988 = vunpack.c.l.b16 %v772
        %v989 = vunpack.c.h.b16 %v772
        %v990 = vunpack.c.l.b16 %v773
        %v991 = vunpack.c.h.b16 %v773
        %v992 = vunpack.c.l.b16 %v774
        %v993 = vunpack.c.h.b16 %v774
        %v994 = vunpack.c.l.b16 %v775
        %v995 = vunpack.c.h.b16 %v775
        %v996 = vunpack.c.l.b16 %v776
        %v997 = vunpack.c.h.b16 %v776
        %v998 = vpack.c.b16 %v872, %v870
        %v999 = vpack.c.b16 %v873, %v871
        %v1000 = vpack.c.b16 %v876, %v874
        %v1001 = vpack.c.b16 %v877, %v875
        %v1002 = vpack.c.b16 %v880, %v878
        %v1003 = vpack.c.b16 %v881, %v879
        %v1004 = vpack.c.b16 %v884, %v882
        %v1005 = vpack.c.b16 %v885, %v883
        %v1006 = vpack.c.b16 %v888, %v886
        %v1007 = vpack.c.b16 %v889, %v887
        %v1008 = vpack.c.b16 %v892, %v890
        %v1009 = vpack.c.b16 %v893, %v891
        %v1010 = vpack.c.b16 %v896, %v894
        %v1011 = vpack.c.b16 %v897, %v895
        %v1012 = vpack.c.b16 %v900, %v898
        %v1013 = vpack.c.b16 %v901, %v899
        %v1014 = vpack.c.b16 %v904, %v902
        %v1015 = vpack.c.b16 %v905, %v903
        %v1016 = vpack.c.b16 %v908, %v906
        %v1017 = vpack.c.b16 %v909, %v907
        %v1018 = vpack.c.b16 %v912, %v910
        %v1019 = vpack.c.b16 %v913, %v911
        %v1020 = vpack.c.b16 %v916, %v914
        %v1021 = vpack.c.b16 %v917, %v915
        %v1022 = vpack.c.b16 %v920, %v918
        %v1023 = vpack.c.b16 %v921, %v919
        %v1024 = vpack.c.b16 %v924, %v922
        %v1025 = vpack.c.b16 %v925, %v923
        %v1026 = vpack.c.b16 %v928, %v926
        %v1027 = vpack.c.b16 %v929, %v927
        %v1028 = vpack.c.b16 %v932, %v930
        %v1029 = vpack.c.b16 %v933, %v931
        %v1030 = vpack.c.b16 %v936, %v934
        %v1031 = vpack.c.b16 %v937, %v935
        %v1032 = vpack.c.b16 %v940, %v938
        %v1033 = vpack.c.b16 %v941, %v939
        %v1034 = vpack.c.b16 %v944, %v942
        %v1035 = vpack.c.b16 %v945, %v943
        %v1036 = vpack.c.b16 %v948, %v946
        %v1037 = vpack.c.b16 %v949, %v947
        %v1038 = vpack.c.b16 %v952, %v950
        %v1039 = vpack.c.b16 %v953, %v951
        %v1040 = vpack.c.b16 %v956, %v954
        %v1041 = vpack.c.b16 %v957, %v955
        %v1042 = vpack.c.b16 %v960, %v958
        %v1043 = vpack.c.b16 %v961, %v959
        %v1044 = vpack.c.b16 %v964, %v962
        %v1045 = vpack.c.b16 %v965, %v963
        %v1046 = vpack.c.b16 %v968, %v966
        %v1047 = vpack.c.b16 %v969, %v967
        %v1048 = vpack.c.b16 %v972, %v970
        %v1049 = vpack.c.b16 %v973, %v971
        %v1050 = vpack.c.b16 %v976, %v974
        %v1051 = vpack.c.b16 %v977, %v975
        %v1052 = vpack.c.b16 %v980, %v978
        %v1053 = vpack.c.b16 %v981, %v979
        %v1054 = vpack.c.b16 %v984, %v982
        %v1055 = vpack.c.b16 %v985, %v983
        %v1056 = vpack.c.b16 %v988, %v986
        %v1057 = vpack.c.b16 %v989, %v987
        %v1058 = vpack.c.b16 %v992, %v990
        %v1059 = vpack.c.b16 %v993, %v991
        %v1060 = vpack.c.b16 %v996, %v994
        %v1061 = vpack.c.b16 %v997, %v995
        %1126 = vmatprep.subr.bf16.mxu0 %v999
        %1127 = vmatpush1.bf16.msra.mxu0 %v998
        %1128 = vmatprep.subr.bf16.mxu0 %v1001
        %1129 = vmatpush1.bf16.msra.mxu0 %v1000
        %1130 = vmatprep.subr.bf16.mxu0 %v1003
        %1131 = vmatpush1.bf16.msra.mxu0 %v1002
        %1132 = vmatprep.subr.bf16.mxu0 %v1005
        %1133 = vmatpush1.bf16.msra.mxu0 %v1004
        %1134 = vmatprep.subr.bf16.mxu0 %v1007
        %1135 = vmatpush1.bf16.msra.mxu0 %v1006
        %1136 = vmatprep.subr.bf16.mxu0 %v1009
        %1137 = vmatpush1.bf16.msra.mxu0 %v1008
        %1138 = vmatprep.subr.bf16.mxu0 %v1011
        %1139 = vmatpush1.bf16.msra.mxu0 %v1010
        %1140 = vmatprep.subr.bf16.mxu0 %v1013
        %1141 = vmatpush1.bf16.msra.mxu0 %v1012
        %1142 = vmatprep.subr.bf16.mxu0 %v1015
        %1143 = vmatpush1.bf16.msra.mxu0 %v1014
        %1144 = vmatprep.subr.bf16.mxu0 %v1017
        %1145 = vmatpush1.bf16.msra.mxu0 %v1016
        %1146 = vmatprep.subr.bf16.mxu0 %v1019
        %1147 = vmatpush1.bf16.msra.mxu0 %v1018
        %1148 = vmatprep.subr.bf16.mxu0 %v1021
        %1149 = vmatpush1.bf16.msra.mxu0 %v1020
        %1150 = vmatprep.subr.bf16.mxu0 %v1023
        %1151 = vmatpush1.bf16.msra.mxu0 %v1022
        %1152 = vmatprep.subr.bf16.mxu0 %v1025
        %1153 = vmatpush1.bf16.msra.mxu0 %v1024
        %1154 = vmatprep.subr.bf16.mxu0 %v1027
        %1155 = vmatpush1.bf16.msra.mxu0 %v1026
        %1156 = vmatprep.subr.bf16.mxu0 %v1029
        %1157 = vmatpush1.bf16.msra.mxu0 %v1028
        %1158 = vmatprep.mubr.bf16.mxu0 %v799
        %1159 = vmatmul.mubr.bf16.gmra.mrb[0].mxu0 %v792
        %v1160 = vpop.f32.mrb[0].mxu0
        %v1161 = vadd.f32 0.0, %v1160
        %v1162 = vpop.f32.mrb[0].mxu0
        %v1163 = vadd.f32 0.0, %v1162
        %v1164 = vpop.f32.mrb[0].mxu0
        %v1165 = vpop.f32.mrb[0].mxu0
        %1166 = vdwg.mxu0
        %1167 = vmatprep.subr.bf16.mxu0 %v1031
        %1168 = vmatpush1.bf16.msra.mxu0 %v1030
        %1169 = vmatprep.subr.bf16.mxu0 %v1033
        %1170 = vmatpush1.bf16.msra.mxu0 %v1032
        %1171 = vmatprep.subr.bf16.mxu0 %v1035
        %1172 = vmatpush1.bf16.msra.mxu0 %v1034
        %1173 = vmatprep.subr.bf16.mxu0 %v1037
        %1174 = vmatpush1.bf16.msra.mxu0 %v1036
        %1175 = vmatprep.subr.bf16.mxu0 %v1039
        %1176 = vmatpush1.bf16.msra.mxu0 %v1038
        %1177 = vmatprep.subr.bf16.mxu0 %v1041
        %1178 = vmatpush1.bf16.msra.mxu0 %v1040
        %1179 = vmatprep.subr.bf16.mxu0 %v1043
        %1180 = vmatpush1.bf16.msra.mxu0 %v1042
        %1181 = vmatprep.subr.bf16.mxu0 %v1045
        %1182 = vmatpush1.bf16.msra.mxu0 %v1044
        %1183 = vmatprep.subr.bf16.mxu0 %v1047
        %1184 = vmatpush1.bf16.msra.mxu0 %v1046
        %1185 = vmatprep.subr.bf16.mxu0 %v1049
        %1186 = vmatpush1.bf16.msra.mxu0 %v1048
        %1187 = vmatprep.subr.bf16.mxu0 %v1051
        %1188 = vmatpush1.bf16.msra.mxu0 %v1050
        %1189 = vmatprep.subr.bf16.mxu0 %v1053
        %1190 = vmatpush1.bf16.msra.mxu0 %v1052
        %1191 = vmatprep.subr.bf16.mxu0 %v1055
        %1192 = vmatpush1.bf16.msra.mxu0 %v1054
        %1193 = vmatprep.subr.bf16.mxu0 %v1057
        %1194 = vmatpush1.bf16.msra.mxu0 %v1056
        %1195 = vmatprep.subr.bf16.mxu0 %v1059
        %1196 = vmatpush1.bf16.msra.mxu0 %v1058
        %1197 = vmatprep.subr.bf16.mxu0 %v1061
        %1198 = vmatpush1.bf16.msra.mxu0 %v1060
        %1199 = vmatprep.mubr.bf16.mxu0 %v801
        %1200 = vmatmul.mubr.bf16.gmra.mrb[0].mxu0 %v800
        %v1201 = vpop.f32.mrb[0].mxu0
        %v1202 = vadd.f32 %v1161, %v1201
        %v1203 = vpop.f32.mrb[0].mxu0
        %v1204 = vadd.f32 %v1163, %v1203
        %v1205 = vpop.f32.mrb[0].mxu0
        %v1206 = vpop.f32.mrb[0].mxu0
        %1207 = vdwg.mxu0
        %v1210 = vcombine.low %v1202, %v1204
        %v1212 = vunpack.c.l.s4 1983009808
        %v1213 = vunpack.c.0.s8 %v1212
        %v1214 = vlaneseq
        %v1215 = vshrl.u32 %v1214, 7
        %v1216 = vsub.s32 %v1213, %v1215
        %v1217 = vrot.slane %v1210, %v1216
        %v1219 = vadd.f32 %v711, %v1217
        %1220 = vst [vmem:[#allocation2] sm:$0xf] %v1219
        %v1221 = vld [vmem:[#allocation3] sm:$0xf]
        %v1222 = vpack.c.bf16 %v703, %v703
        %v1223 = vpack.c.bf16 %v704, %v704
        %v1224 = vpack.c.bf16 %v705, %v705
        %v1225 = vpack.c.bf16 %v706, %v706
        %v1226 = vpack.c.bf16 %v707, %v707
        %v1227 = vpack.c.bf16 %v708, %v708
        %v1228 = vpack.c.bf16 %v709, %v709
        %v1229 = vpack.c.bf16 %v710, %v710
        %v1230 = vld [vmem:[%s523] sm:$0xff]
        %v1231 = vld [vmem:[%s523 + $0x8] sm:$0xff]
        %v1232 = vld [vmem:[%s523 + $0x10] sm:$0xff]
        %v1233 = vld [vmem:[%s523 + $0x18] sm:$0xff]
        %v1234 = vld [vmem:[%s523 + $0x20] sm:$0xff]
        %v1235 = vld [vmem:[%s523 + $0x28] sm:$0xff]
        %v1236 = vld [vmem:[%s523 + $0x30] sm:$0xff]
        %v1237 = vld [vmem:[%s523 + $0x38] sm:$0xff]
        %v1238 = vld [vmem:[%s523 + $0x40] sm:$0xff]
        %v1239 = vld [vmem:[%s523 + $0x48] sm:$0xff]
        %v1240 = vld [vmem:[%s523 + $0x50] sm:$0xff]
        %v1241 = vld [vmem:[%s523 + $0x58] sm:$0xff]
        %v1242 = vld [vmem:[%s523 + $0x60] sm:$0xff]
        %v1243 = vld [vmem:[%s523 + $0x68] sm:$0xff]
        %v1244 = vld [vmem:[%s523 + $0x70] sm:$0xff]
        %v1245 = vld [vmem:[%s523 + $0x78] sm:$0xff]
        %v1246 = vld [vmem:[%s523 + $0x80] sm:$0xff]
        %v1247 = vld [vmem:[%s523 + $0x88] sm:$0xff]
        %v1248 = vld [vmem:[%s523 + $0x90] sm:$0xff]
        %v1249 = vld [vmem:[%s523 + $0x98] sm:$0xff]
        %v1250 = vld [vmem:[%s523 + $0xa0] sm:$0xff]
        %v1251 = vld [vmem:[%s523 + $0xa8] sm:$0xff]
        %v1252 = vld [vmem:[%s523 + $0xb0] sm:$0xff]
        %v1253 = vld [vmem:[%s523 + $0xb8] sm:$0xff]
        %v1254 = vld [vmem:[%s523 + $0xc0] sm:$0xff]
        %v1255 = vld [vmem:[%s523 + $0xc8] sm:$0xff]
        %v1256 = vld [vmem:[%s523 + $0xd0] sm:$0xff]
        %v1257 = vld [vmem:[%s523 + $0xd8] sm:$0xff]
        %v1258 = vld [vmem:[%s523 + $0xe0] sm:$0xff]
        %v1259 = vld [vmem:[%s523 + $0xe8] sm:$0xff]
        %v1260 = vld [vmem:[%s523 + $0xf0] sm:$0xff]
        %v1261 = vld [vmem:[%s523 + $0xf8] sm:$0xff]
        %v1262 = vld [vmem:[%s523 + $0x100] sm:$0xff]
        %v1263 = vld [vmem:[%s523 + $0x108] sm:$0xff]
        %v1264 = vld [vmem:[%s523 + $0x110] sm:$0xff]
        %v1265 = vld [vmem:[%s523 + $0x118] sm:$0xff]
        %v1266 = vld [vmem:[%s523 + $0x120] sm:$0xff]
        %v1267 = vld [vmem:[%s523 + $0x128] sm:$0xff]
        %v1268 = vld [vmem:[%s523 + $0x130] sm:$0xff]
        %v1269 = vld [vmem:[%s523 + $0x138] sm:$0xff]
        %v1270 = vld [vmem:[%s523 + $0x140] sm:$0xff]
        %v1271 = vld [vmem:[%s523 + $0x148] sm:$0xff]
        %v1272 = vld [vmem:[%s523 + $0x150] sm:$0xff]
        %v1273 = vld [vmem:[%s523 + $0x158] sm:$0xff]
        %v1274 = vld [vmem:[%s523 + $0x160] sm:$0xff]
        %v1275 = vld [vmem:[%s523 + $0x168] sm:$0xff]
        %v1276 = vld [vmem:[%s523 + $0x170] sm:$0xff]
        %v1277 = vld [vmem:[%s523 + $0x178] sm:$0xff]
        %v1278 = vld [vmem:[%s523 + $0x180] sm:$0xff]
        %v1279 = vld [vmem:[%s523 + $0x188] sm:$0xff]
        %v1280 = vld [vmem:[%s523 + $0x190] sm:$0xff]
        %v1281 = vld [vmem:[%s523 + $0x198] sm:$0xff]
        %v1282 = vld [vmem:[%s523 + $0x1a0] sm:$0xff]
        %v1283 = vld [vmem:[%s523 + $0x1a8] sm:$0xff]
        %v1284 = vld [vmem:[%s523 + $0x1b0] sm:$0xff]
        %v1285 = vld [vmem:[%s523 + $0x1b8] sm:$0xff]
        %v1286 = vld [vmem:[%s523 + $0x1c0] sm:$0xff]
        %v1287 = vld [vmem:[%s523 + $0x1c8] sm:$0xff]
        %v1288 = vld [vmem:[%s523 + $0x1d0] sm:$0xff]
        %v1289 = vld [vmem:[%s523 + $0x1d8] sm:$0xff]
        %v1290 = vld [vmem:[%s523 + $0x1e0] sm:$0xff]
        %v1291 = vld [vmem:[%s523 + $0x1e8] sm:$0xff]
        %v1292 = vld [vmem:[%s523 + $0x1f0] sm:$0xff]
        %v1293 = vld [vmem:[%s523 + $0x1f8] sm:$0xff]
        %v1302 = vunpack.c.l.b16 %v1222
        %v1303 = vunpack.c.l.b16 %v1223
        %v1304 = vunpack.c.l.b16 %v1224
        %v1305 = vunpack.c.l.b16 %v1225
        %v1306 = vunpack.c.l.b16 %v1226
        %v1307 = vunpack.c.l.b16 %v1227
        %v1308 = vunpack.c.l.b16 %v1228
        %v1309 = vunpack.c.l.b16 %v1229
        %vm1310 = vcmask 1041409
        %v1311 = vsel %vm1310, %v1306, %v1302
        %v1312 = vsel %vm1310, %v1307, %v1303
        %v1313 = vsel %vm1310, %v1308, %v1304
        %v1314 = vsel %vm1310, %v1309, %v1305
        %v1315 = vpack.c.b16 %v1311, %v1311
        %v1316 = vpack.c.b16 %v1312, %v1312
        %v1317 = vpack.c.b16 %v1313, %v1313
        %v1318 = vpack.c.b16 %v1314, %v1314
        %v1387 = vunpack.c.l.b16 %v1230
        %v1388 = vunpack.c.h.b16 %v1230
        %v1389 = vunpack.c.l.b16 %v1231
        %v1390 = vunpack.c.h.b16 %v1231
        %v1391 = vunpack.c.l.b16 %v1232
        %v1392 = vunpack.c.h.b16 %v1232
        %v1393 = vunpack.c.l.b16 %v1233
        %v1394 = vunpack.c.h.b16 %v1233
        %v1395 = vunpack.c.l.b16 %v1234
        %v1396 = vunpack.c.h.b16 %v1234
        %v1397 = vunpack.c.l.b16 %v1235
        %v1398 = vunpack.c.h.b16 %v1235
        %v1399 = vunpack.c.l.b16 %v1236
        %v1400 = vunpack.c.h.b16 %v1236
        %v1401 = vunpack.c.l.b16 %v1237
        %v1402 = vunpack.c.h.b16 %v1237
        %v1403 = vunpack.c.l.b16 %v1238
        %v1404 = vunpack.c.h.b16 %v1238
        %v1405 = vunpack.c.l.b16 %v1239
        %v1406 = vunpack.c.h.b16 %v1239
        %v1407 = vunpack.c.l.b16 %v1240
        %v1408 = vunpack.c.h.b16 %v1240
        %v1409 = vunpack.c.l.b16 %v1241
        %v1410 = vunpack.c.h.b16 %v1241
        %v1411 = vunpack.c.l.b16 %v1242
        %v1412 = vunpack.c.h.b16 %v1242
        %v1413 = vunpack.c.l.b16 %v1243
        %v1414 = vunpack.c.h.b16 %v1243
        %v1415 = vunpack.c.l.b16 %v1244
        %v1416 = vunpack.c.h.b16 %v1244
        %v1417 = vunpack.c.l.b16 %v1245
        %v1418 = vunpack.c.h.b16 %v1245
        %v1419 = vunpack.c.l.b16 %v1246
        %v1420 = vunpack.c.h.b16 %v1246
        %v1421 = vunpack.c.l.b16 %v1247
        %v1422 = vunpack.c.h.b16 %v1247
        %v1423 = vunpack.c.l.b16 %v1248
        %v1424 = vunpack.c.h.b16 %v1248
        %v1425 = vunpack.c.l.b16 %v1249
        %v1426 = vunpack.c.h.b16 %v1249
        %v1427 = vunpack.c.l.b16 %v1250
        %v1428 = vunpack.c.h.b16 %v1250
        %v1429 = vunpack.c.l.b16 %v1251
        %v1430 = vunpack.c.h.b16 %v1251
        %v1431 = vunpack.c.l.b16 %v1252
        %v1432 = vunpack.c.h.b16 %v1252
        %v1433 = vunpack.c.l.b16 %v1253
        %v1434 = vunpack.c.h.b16 %v1253
        %v1435 = vunpack.c.l.b16 %v1254
        %v1436 = vunpack.c.h.b16 %v1254
        %v1437 = vunpack.c.l.b16 %v1255
        %v1438 = vunpack.c.h.b16 %v1255
        %v1439 = vunpack.c.l.b16 %v1256
        %v1440 = vunpack.c.h.b16 %v1256
        %v1441 = vunpack.c.l.b16 %v1257
        %v1442 = vunpack.c.h.b16 %v1257
        %v1443 = vunpack.c.l.b16 %v1258
        %v1444 = vunpack.c.h.b16 %v1258
        %v1445 = vunpack.c.l.b16 %v1259
        %v1446 = vunpack.c.h.b16 %v1259
        %v1447 = vunpack.c.l.b16 %v1260
        %v1448 = vunpack.c.h.b16 %v1260
        %v1449 = vunpack.c.l.b16 %v1261
        %v1450 = vunpack.c.h.b16 %v1261
        %v1451 = vunpack.c.l.b16 %v1262
        %v1452 = vunpack.c.h.b16 %v1262
        %v1453 = vunpack.c.l.b16 %v1263
        %v1454 = vunpack.c.h.b16 %v1263
        %v1455 = vunpack.c.l.b16 %v1264
        %v1456 = vunpack.c.h.b16 %v1264
        %v1457 = vunpack.c.l.b16 %v1265
        %v1458 = vunpack.c.h.b16 %v1265
        %v1459 = vunpack.c.l.b16 %v1266
        %v1460 = vunpack.c.h.b16 %v1266
        %v1461 = vunpack.c.l.b16 %v1267
        %v1462 = vunpack.c.h.b16 %v1267
        %v1463 = vunpack.c.l.b16 %v1268
        %v1464 = vunpack.c.h.b16 %v1268
        %v1465 = vunpack.c.l.b16 %v1269
        %v1466 = vunpack.c.h.b16 %v1269
        %v1467 = vunpack.c.l.b16 %v1270
        %v1468 = vunpack.c.h.b16 %v1270
        %v1469 = vunpack.c.l.b16 %v1271
        %v1470 = vunpack.c.h.b16 %v1271
        %v1471 = vunpack.c.l.b16 %v1272
        %v1472 = vunpack.c.h.b16 %v1272
        %v1473 = vunpack.c.l.b16 %v1273
        %v1474 = vunpack.c.h.b16 %v1273
        %v1475 = vunpack.c.l.b16 %v1274
        %v1476 = vunpack.c.h.b16 %v1274
        %v1477 = vunpack.c.l.b16 %v1275
        %v1478 = vunpack.c.h.b16 %v1275
        %v1479 = vunpack.c.l.b16 %v1276
        %v1480 = vunpack.c.h.b16 %v1276
        %v1481 = vunpack.c.l.b16 %v1277
        %v1482 = vunpack.c.h.b16 %v1277
        %v1483 = vunpack.c.l.b16 %v1278
        %v1484 = vunpack.c.h.b16 %v1278
        %v1485 = vunpack.c.l.b16 %v1279
        %v1486 = vunpack.c.h.b16 %v1279
        %v1487 = vunpack.c.l.b16 %v1280
        %v1488 = vunpack.c.h.b16 %v1280
        %v1489 = vunpack.c.l.b16 %v1281
        %v1490 = vunpack.c.h.b16 %v1281
        %v1491 = vunpack.c.l.b16 %v1282
        %v1492 = vunpack.c.h.b16 %v1282
        %v1493 = vunpack.c.l.b16 %v1283
        %v1494 = vunpack.c.h.b16 %v1283
        %v1495 = vunpack.c.l.b16 %v1284
        %v1496 = vunpack.c.h.b16 %v1284
        %v1497 = vunpack.c.l.b16 %v1285
        %v1498 = vunpack.c.h.b16 %v1285
        %v1499 = vunpack.c.l.b16 %v1286
        %v1500 = vunpack.c.h.b16 %v1286
        %v1501 = vunpack.c.l.b16 %v1287
        %v1502 = vunpack.c.h.b16 %v1287
        %v1503 = vunpack.c.l.b16 %v1288
        %v1504 = vunpack.c.h.b16 %v1288
        %v1505 = vunpack.c.l.b16 %v1289
        %v1506 = vunpack.c.h.b16 %v1289
        %v1507 = vunpack.c.l.b16 %v1290
        %v1508 = vunpack.c.h.b16 %v1290
        %v1509 = vunpack.c.l.b16 %v1291
        %v1510 = vunpack.c.h.b16 %v1291
        %v1511 = vunpack.c.l.b16 %v1292
        %v1512 = vunpack.c.h.b16 %v1292
        %v1513 = vunpack.c.l.b16 %v1293
        %v1514 = vunpack.c.h.b16 %v1293
        %v1515 = vpack.c.b16 %v1389, %v1387
        %v1516 = vpack.c.b16 %v1390, %v1388
        %v1517 = vpack.c.b16 %v1393, %v1391
        %v1518 = vpack.c.b16 %v1394, %v1392
        %v1519 = vpack.c.b16 %v1397, %v1395
        %v1520 = vpack.c.b16 %v1398, %v1396
        %v1521 = vpack.c.b16 %v1401, %v1399
        %v1522 = vpack.c.b16 %v1402, %v1400
        %v1523 = vpack.c.b16 %v1405, %v1403
        %v1524 = vpack.c.b16 %v1406, %v1404
        %v1525 = vpack.c.b16 %v1409, %v1407
        %v1526 = vpack.c.b16 %v1410, %v1408
        %v1527 = vpack.c.b16 %v1413, %v1411
        %v1528 = vpack.c.b16 %v1414, %v1412
        %v1529 = vpack.c.b16 %v1417, %v1415
        %v1530 = vpack.c.b16 %v1418, %v1416
        %v1531 = vpack.c.b16 %v1421, %v1419
        %v1532 = vpack.c.b16 %v1422, %v1420
        %v1533 = vpack.c.b16 %v1425, %v1423
        %v1534 = vpack.c.b16 %v1426, %v1424
        %v1535 = vpack.c.b16 %v1429, %v1427
        %v1536 = vpack.c.b16 %v1430, %v1428
        %v1537 = vpack.c.b16 %v1433, %v1431
        %v1538 = vpack.c.b16 %v1434, %v1432
        %v1539 = vpack.c.b16 %v1437, %v1435
        %v1540 = vpack.c.b16 %v1438, %v1436
        %v1541 = vpack.c.b16 %v1441, %v1439
        %v1542 = vpack.c.b16 %v1442, %v1440
        %v1543 = vpack.c.b16 %v1445, %v1443
        %v1544 = vpack.c.b16 %v1446, %v1444
        %v1545 = vpack.c.b16 %v1449, %v1447
        %v1546 = vpack.c.b16 %v1450, %v1448
        %v1547 = vpack.c.b16 %v1453, %v1451
        %v1548 = vpack.c.b16 %v1454, %v1452
        %v1549 = vpack.c.b16 %v1457, %v1455
        %v1550 = vpack.c.b16 %v1458, %v1456
        %v1551 = vpack.c.b16 %v1461, %v1459
        %v1552 = vpack.c.b16 %v1462, %v1460
        %v1553 = vpack.c.b16 %v1465, %v1463
        %v1554 = vpack.c.b16 %v1466, %v1464
        %v1555 = vpack.c.b16 %v1469, %v1467
        %v1556 = vpack.c.b16 %v1470, %v1468
        %v1557 = vpack.c.b16 %v1473, %v1471
        %v1558 = vpack.c.b16 %v1474, %v1472
        %v1559 = vpack.c.b16 %v1477, %v1475
        %v1560 = vpack.c.b16 %v1478, %v1476
        %v1561 = vpack.c.b16 %v1481, %v1479
        %v1562 = vpack.c.b16 %v1482, %v1480
        %v1563 = vpack.c.b16 %v1485, %v1483
        %v1564 = vpack.c.b16 %v1486, %v1484
        %v1565 = vpack.c.b16 %v1489, %v1487
        %v1566 = vpack.c.b16 %v1490, %v1488
        %v1567 = vpack.c.b16 %v1493, %v1491
        %v1568 = vpack.c.b16 %v1494, %v1492
        %v1569 = vpack.c.b16 %v1497, %v1495
        %v1570 = vpack.c.b16 %v1498, %v1496
        %v1571 = vpack.c.b16 %v1501, %v1499
        %v1572 = vpack.c.b16 %v1502, %v1500
        %v1573 = vpack.c.b16 %v1505, %v1503
        %v1574 = vpack.c.b16 %v1506, %v1504
        %v1575 = vpack.c.b16 %v1509, %v1507
        %v1576 = vpack.c.b16 %v1510, %v1508
        %v1577 = vpack.c.b16 %v1513, %v1511
        %v1578 = vpack.c.b16 %v1514, %v1512
        %1643 = vmatprep.subr.bf16.mxu0 %v1516
        %1644 = vmatpush1.bf16.msra.mxu0 %v1515
        %1645 = vmatprep.subr.bf16.mxu0 %v1518
        %1646 = vmatpush1.bf16.msra.mxu0 %v1517
        %1647 = vmatprep.subr.bf16.mxu0 %v1520
        %1648 = vmatpush1.bf16.msra.mxu0 %v1519
        %1649 = vmatprep.subr.bf16.mxu0 %v1522
        %1650 = vmatpush1.bf16.msra.mxu0 %v1521
        %1651 = vmatprep.subr.bf16.mxu0 %v1524
        %1652 = vmatpush1.bf16.msra.mxu0 %v1523
        %1653 = vmatprep.subr.bf16.mxu0 %v1526
        %1654 = vmatpush1.bf16.msra.mxu0 %v1525
        %1655 = vmatprep.subr.bf16.mxu0 %v1528
        %1656 = vmatpush1.bf16.msra.mxu0 %v1527
        %1657 = vmatprep.subr.bf16.mxu0 %v1530
        %1658 = vmatpush1.bf16.msra.mxu0 %v1529
        %1659 = vmatprep.subr.bf16.mxu0 %v1532
        %1660 = vmatpush1.bf16.msra.mxu0 %v1531
        %1661 = vmatprep.subr.bf16.mxu0 %v1534
        %1662 = vmatpush1.bf16.msra.mxu0 %v1533
        %1663 = vmatprep.subr.bf16.mxu0 %v1536
        %1664 = vmatpush1.bf16.msra.mxu0 %v1535
        %1665 = vmatprep.subr.bf16.mxu0 %v1538
        %1666 = vmatpush1.bf16.msra.mxu0 %v1537
        %1667 = vmatprep.subr.bf16.mxu0 %v1540
        %1668 = vmatpush1.bf16.msra.mxu0 %v1539
        %1669 = vmatprep.subr.bf16.mxu0 %v1542
        %1670 = vmatpush1.bf16.msra.mxu0 %v1541
        %1671 = vmatprep.subr.bf16.mxu0 %v1544
        %1672 = vmatpush1.bf16.msra.mxu0 %v1543
        %1673 = vmatprep.subr.bf16.mxu0 %v1546
        %1674 = vmatpush1.bf16.msra.mxu0 %v1545
        %1675 = vmatprep.mubr.bf16.mxu0 %v1316
        %1676 = vmatmul.mubr.bf16.gmra.mrb[0].mxu0 %v1315
        %v1677 = vpop.f32.mrb[0].mxu0
        %v1678 = vadd.f32 0.0, %v1677
        %v1679 = vpop.f32.mrb[0].mxu0
        %v1680 = vadd.f32 0.0, %v1679
        %v1681 = vpop.f32.mrb[0].mxu0
        %v1682 = vpop.f32.mrb[0].mxu0
        %1683 = vdwg.mxu0
        %1684 = vmatprep.subr.bf16.mxu0 %v1548
        %1685 = vmatpush1.bf16.msra.mxu0 %v1547
        %1686 = vmatprep.subr.bf16.mxu0 %v1550
        %1687 = vmatpush1.bf16.msra.mxu0 %v1549
        %1688 = vmatprep.subr.bf16.mxu0 %v1552
        %1689 = vmatpush1.bf16.msra.mxu0 %v1551
        %1690 = vmatprep.subr.bf16.mxu0 %v1554
        %1691 = vmatpush1.bf16.msra.mxu0 %v1553
        %1692 = vmatprep.subr.bf16.mxu0 %v1556
        %1693 = vmatpush1.bf16.msra.mxu0 %v1555
        %1694 = vmatprep.subr.bf16.mxu0 %v1558
        %1695 = vmatpush1.bf16.msra.mxu0 %v1557
        %1696 = vmatprep.subr.bf16.mxu0 %v1560
        %1697 = vmatpush1.bf16.msra.mxu0 %v1559
        %1698 = vmatprep.subr.bf16.mxu0 %v1562
        %1699 = vmatpush1.bf16.msra.mxu0 %v1561
        %1700 = vmatprep.subr.bf16.mxu0 %v1564
        %1701 = vmatpush1.bf16.msra.mxu0 %v1563
        %1702 = vmatprep.subr.bf16.mxu0 %v1566
        %1703 = vmatpush1.bf16.msra.mxu0 %v1565
        %1704 = vmatprep.subr.bf16.mxu0 %v1568
        %1705 = vmatpush1.bf16.msra.mxu0 %v1567
        %1706 = vmatprep.subr.bf16.mxu0 %v1570
        %1707 = vmatpush1.bf16.msra.mxu0 %v1569
        %1708 = vmatprep.subr.bf16.mxu0 %v1572
        %1709 = vmatpush1.bf16.msra.mxu0 %v1571
        %1710 = vmatprep.subr.bf16.mxu0 %v1574
        %1711 = vmatpush1.bf16.msra.mxu0 %v1573
        %1712 = vmatprep.subr.bf16.mxu0 %v1576
        %1713 = vmatpush1.bf16.msra.mxu0 %v1575
        %1714 = vmatprep.subr.bf16.mxu0 %v1578
        %1715 = vmatpush1.bf16.msra.mxu0 %v1577
        %1716 = vmatprep.mubr.bf16.mxu0 %v1318
        %1717 = vmatmul.mubr.bf16.gmra.mrb[0].mxu0 %v1317
        %v1718 = vpop.f32.mrb[0].mxu0
        %v1719 = vadd.f32 %v1678, %v1718
        %v1720 = vpop.f32.mrb[0].mxu0
        %v1721 = vadd.f32 %v1680, %v1720
        %v1722 = vpop.f32.mrb[0].mxu0
        %v1723 = vpop.f32.mrb[0].mxu0
        %1724 = vdwg.mxu0
        %v1727 = vcombine.low %v1719, %v1721
        %v1729 = vunpack.c.l.s4 1983009808
        %v1730 = vunpack.c.0.s8 %v1729
        %v1731 = vlaneseq
        %v1732 = vshrl.u32 %v1731, 7
        %v1733 = vsub.s32 %v1730, %v1732
        %v1734 = vrot.slane %v1727, %v1733
        %v1736 = vadd.f32 %v1221, %v1734
        %1737 = vst [vmem:[#allocation3] sm:$0xf] %v1736
        %p1738 = scmp.eq.s32.totalorder %s23, 1
        // Predicated region
        $region92: #{_lambda_.1} parent=82 // pred_check
          %p1739 = pneg %p1738
        $region93: #{_lambda_.1} parent=82 // pred_check_branch
          %1741 = sbr.rel (%p1739) target = $region95
        $region94: #{_lambda_.1} parent=82 // pred_region
          %v1742 = vld [vmem:[%s3] sm:$0xff]
          %v1743 = vld [vmem:[%s3 + $0x8] sm:$0xff]
          %vm1744 = vcmask 261120
          %v1745 = vsel %vm1744, %v1742, 0.0
          %v1746 = vrot.slane %v1745, 4
          %v1747 = vadd.f32 %v1745, %v1746
          %v1748 = vrot.slane %v1747, 2
          %v1749 = vadd.f32 %v1747, %v1748
          %v1750 = vrot.slane %v1749, 1
          %v1751 = vadd.f32 %v1749, %v1750
          %v1752 = vsel %vm1744, %v1743, 0.0
          %v1753 = vrot.slane %v1752, 4
          %v1754 = vadd.f32 %v1752, %v1753
          %v1755 = vrot.slane %v1754, 2
          %v1756 = vadd.f32 %v1754, %v1755
          %v1757 = vrot.slane %v1756, 1
          %v1758 = vadd.f32 %v1756, %v1757
          %v1759 = vrcp.pop 8.0
          %v1760 = vmul.f32 %v1751, %v1759
          %v1761 = vmul.f32 %v1758, %v1759
          %v1762 = vpack.c.bf16 %v1760, %v1760
          %v1763 = vpack.c.bf16 %v1761, %v1761
          %v1764 = vld [vmem:[%s7] sm:$0xff]
          %v1765 = vld [vmem:[%s7 + $0x8] sm:$0xff]
          %v1766 = vld [vmem:[%s7 + $0x10] sm:$0xff]
          %v1767 = vld [vmem:[%s7 + $0x18] sm:$0xff]
          %s1768 = scalar_lea.vmem %s10, 1
          %v1769 = vld [vmem:[%s1768] ss:$4 sm:$0x3]
          %v1771 = vlaneseq
          %v1772 = vshrl.u32 %v1771, 7
          %v1773 = vsub.s32 0, %v1772
          %v1774 = vrot.slane %v1769, %v1773
          %v1775 = vlaneseq
          %v1776 = vshrl.u32 %v1775, 7
          %v1777 = vsub.s32 1, %v1776
          %v1778 = vrot.slane %v1769, %v1777
          %v1783 = vunpack.c.l.b16 %v1762
          %v1784 = vunpack.c.l.b16 %v1763
          %v1785 = vsel %vm1310, %v1784, %v1783
          %v1786 = vpack.c.b16 %v1785, %v1785
          %v1791 = vunpack.c.l.b16 %v1764
          %v1792 = vunpack.c.h.b16 %v1764
          %v1793 = vunpack.c.l.b16 %v1765
          %v1794 = vunpack.c.h.b16 %v1765
          %v1795 = vunpack.c.l.b16 %v1766
          %v1796 = vunpack.c.h.b16 %v1766
          %v1797 = vunpack.c.l.b16 %v1767
          %v1798 = vunpack.c.h.b16 %v1767
          %v1799 = vpack.c.b16 %v1793, %v1791
          %v1800 = vpack.c.b16 %v1794, %v1792
          %v1801 = vpack.c.b16 %v1797, %v1795
          %v1802 = vpack.c.b16 %v1798, %v1796
          %v1808 = vsel %vm1744, %v1786, 0
          %1810 = vmatprep.subr.bf16.mxu0 %v1800
          %1811 = vmatpush1.bf16.msra.mxu0 %v1799
          %1812 = vmatprep.subr.bf16.mxu0 %v1802
          %1813 = vmatpush1.bf16.msra.mxu0 %v1801
          %1814 = vmatprep.subr.bf16.mxu0 0
          %1815 = vmatpush1.bf16.msra.mxu0 0
          %1816 = vmatprep.subr.bf16.mxu0 0
          %1817 = vmatpush1.bf16.msra.mxu0 0
          %1818 = vmatprep.subr.bf16.mxu0 0
          %1819 = vmatpush1.bf16.msra.mxu0 0
          %1820 = vmatprep.subr.bf16.mxu0 0
          %1821 = vmatpush1.bf16.msra.mxu0 0
          %1822 = vmatprep.subr.bf16.mxu0 0
          %1823 = vmatpush1.bf16.msra.mxu0 0
          %1824 = vmatprep.subr.bf16.mxu0 0
          %1825 = vmatpush1.bf16.msra.mxu0 0
          %1826 = vmatprep.subr.bf16.mxu0 0
          %1827 = vmatpush1.bf16.msra.mxu0 0
          %1828 = vmatprep.subr.bf16.mxu0 0
          %1829 = vmatpush1.bf16.msra.mxu0 0
          %1830 = vmatprep.subr.bf16.mxu0 0
          %1831 = vmatpush1.bf16.msra.mxu0 0
          %1832 = vmatprep.subr.bf16.mxu0 0
          %1833 = vmatpush1.bf16.msra.mxu0 0
          %1834 = vmatprep.subr.bf16.mxu0 0
          %1835 = vmatpush1.bf16.msra.mxu0 0
          %1836 = vmatprep.subr.bf16.mxu0 0
          %1837 = vmatpush1.bf16.msra.mxu0 0
          %1838 = vmatprep.subr.bf16.mxu0 0
          %1839 = vmatpush1.bf16.msra.mxu0 0
          %1840 = vmatprep.subr.bf16.mxu0 0
          %1841 = vmatpush1.bf16.msra.mxu0 0
          %1842 = vmatprep.mubr.bf16.mxu0 0
          %1843 = vmatmul.mubr.bf16.gmra.mrb[0].mxu0 %v1808
          %v1844 = vpop.f32.mrb[0].mxu0
          %v1845 = vadd.f32 %v1774, %v1844
          %v1846 = vpop.f32.mrb[0].mxu0
          %v1847 = vadd.f32 %v1778, %v1846
          %v1848 = vpop.f32.mrb[0].mxu0
          %v1849 = vpop.f32.mrb[0].mxu0
          %1850 = vdwg.mxu0
          %v1851 = vld [vmem:[%s5] sm:$0xff]
          %v1852 = vld [vmem:[%s5 + $0x8] sm:$0xff]
          %v1853 = vsel %vm1744, %v1851, 0.0
          %v1854 = vrot.slane %v1853, 4
          %v1855 = vadd.f32 %v1853, %v1854
          %v1856 = vrot.slane %v1855, 2
          %v1857 = vadd.f32 %v1855, %v1856
          %v1858 = vrot.slane %v1857, 1
          %v1859 = vadd.f32 %v1857, %v1858
          %v1860 = vsel %vm1744, %v1852, 0.0
          %v1861 = vrot.slane %v1860, 4
          %v1862 = vadd.f32 %v1860, %v1861
          %v1863 = vrot.slane %v1862, 2
          %v1864 = vadd.f32 %v1862, %v1863
          %v1865 = vrot.slane %v1864, 1
          %v1866 = vadd.f32 %v1864, %v1865
          %v1867 = vmul.f32 %v1859, %v1759
          %v1868 = vmul.f32 %v1866, %v1759
          %v1869 = vpack.c.bf16 %v1867, %v1867
          %v1870 = vpack.c.bf16 %v1868, %v1868
          %v1871 = vld [vmem:[%s9] sm:$0xff]
          %v1872 = vld [vmem:[%s9 + $0x8] sm:$0xff]
          %v1873 = vld [vmem:[%s9 + $0x10] sm:$0xff]
          %v1874 = vld [vmem:[%s9 + $0x18] sm:$0xff]
          %s1875 = scalar_lea.vmem %s10, 3
          %v1876 = vld [vmem:[%s1875] ss:$4 sm:$0x3]
          %v1878 = vlaneseq
          %v1879 = vshrl.u32 %v1878, 7
          %v1880 = vsub.s32 0, %v1879
          %v1881 = vrot.slane %v1876, %v1880
          %v1882 = vlaneseq
          %v1883 = vshrl.u32 %v1882, 7
          %v1884 = vsub.s32 1, %v1883
          %v1885 = vrot.slane %v1876, %v1884
          %v1890 = vunpack.c.l.b16 %v1869
          %v1891 = vunpack.c.l.b16 %v1870
          %v1892 = vsel %vm1310, %v1891, %v1890
          %v1893 = vpack.c.b16 %v1892, %v1892
          %v1898 = vunpack.c.l.b16 %v1871
          %v1899 = vunpack.c.h.b16 %v1871
          %v1900 = vunpack.c.l.b16 %v1872
          %v1901 = vunpack.c.h.b16 %v1872
          %v1902 = vunpack.c.l.b16 %v1873
          %v1903 = vunpack.c.h.b16 %v1873
          %v1904 = vunpack.c.l.b16 %v1874
          %v1905 = vunpack.c.h.b16 %v1874
          %v1906 = vpack.c.b16 %v1900, %v1898
          %v1907 = vpack.c.b16 %v1901, %v1899
          %v1908 = vpack.c.b16 %v1904, %v1902
          %v1909 = vpack.c.b16 %v1905, %v1903
          %v1915 = vsel %vm1744, %v1893, 0
          %1917 = vmatprep.subr.bf16.mxu0 %v1907
          %1918 = vmatpush1.bf16.msra.mxu0 %v1906
          %1919 = vmatprep.subr.bf16.mxu0 %v1909
          %1920 = vmatpush1.bf16.msra.mxu0 %v1908
          %1921 = vmatprep.subr.bf16.mxu0 0
          %1922 = vmatpush1.bf16.msra.mxu0 0
          %1923 = vmatprep.subr.bf16.mxu0 0
          %1924 = vmatpush1.bf16.msra.mxu0 0
          %1925 = vmatprep.subr.bf16.mxu0 0
          %1926 = vmatpush1.bf16.msra.mxu0 0
          %1927 = vmatprep.subr.bf16.mxu0 0
          %1928 = vmatpush1.bf16.msra.mxu0 0
          %1929 = vmatprep.subr.bf16.mxu0 0
          %1930 = vmatpush1.bf16.msra.mxu0 0
          %1931 = vmatprep.subr.bf16.mxu0 0
          %1932 = vmatpush1.bf16.msra.mxu0 0
          %1933 = vmatprep.subr.bf16.mxu0 0
          %1934 = vmatpush1.bf16.msra.mxu0 0
          %1935 = vmatprep.subr.bf16.mxu0 0
          %1936 = vmatpush1.bf16.msra.mxu0 0
          %1937 = vmatprep.subr.bf16.mxu0 0
          %1938 = vmatpush1.bf16.msra.mxu0 0
          %1939 = vmatprep.subr.bf16.mxu0 0
          %1940 = vmatpush1.bf16.msra.mxu0 0
          %1941 = vmatprep.subr.bf16.mxu0 0
          %1942 = vmatpush1.bf16.msra.mxu0 0
          %1943 = vmatprep.subr.bf16.mxu0 0
          %1944 = vmatpush1.bf16.msra.mxu0 0
          %1945 = vmatprep.subr.bf16.mxu0 0
          %1946 = vmatpush1.bf16.msra.mxu0 0
          %1947 = vmatprep.subr.bf16.mxu0 0
          %1948 = vmatpush1.bf16.msra.mxu0 0
          %1949 = vmatprep.mubr.bf16.mxu0 0
          %1950 = vmatmul.mubr.bf16.gmra.mrb[0].mxu0 %v1915
          %v1951 = vpop.f32.mrb[0].mxu0
          %v1952 = vadd.f32 %v1881, %v1951
          %v1953 = vpop.f32.mrb[0].mxu0
          %v1954 = vadd.f32 %v1885, %v1953
          %v1955 = vpop.f32.mrb[0].mxu0
          %v1956 = vpop.f32.mrb[0].mxu0
          %1957 = vdwg.mxu0
          %v1958 = vld [vmem:[#allocation2] sm:$0xf]
          %v1959 = vld [vmem:[%s10] ss:$4 sm:$0x3]
          %v1961 = vlaneseq
          %v1962 = vshrl.u32 %v1961, 7
          %v1963 = vsub.s32 0, %v1962
          %v1964 = vrot.slane %v1959, %v1963
          %v1965 = vlaneseq
          %v1966 = vshrl.u32 %v1965, 7
          %v1967 = vsub.s32 1, %v1966
          %v1968 = vrot.slane %v1959, %v1967
          %v1969 = vcombine.low %v1964, %v1968
          %v1971 = vunpack.c.l.s4 1983009808
          %v1972 = vunpack.c.0.s8 %v1971
          %v1973 = vlaneseq
          %v1974 = vshrl.u32 %v1973, 7
          %v1975 = vsub.s32 %v1972, %v1974
          %v1976 = vrot.slane %v1969, %v1975
          %v1978 = vadd.f32 %v1958, %v1976
          %v1979 = vld [vmem:[#allocation3] sm:$0xf]
          %s1980 = scalar_lea.vmem %s10, 2
          %v1981 = vld [vmem:[%s1980] ss:$4 sm:$0x3]
          %v1983 = vlaneseq
          %v1984 = vshrl.u32 %v1983, 7
          %v1985 = vsub.s32 0, %v1984
          %v1986 = vrot.slane %v1981, %v1985
          %v1987 = vlaneseq
          %v1988 = vshrl.u32 %v1987, 7
          %v1989 = vsub.s32 1, %v1988
          %v1990 = vrot.slane %v1981, %v1989
          %v1991 = vcombine.low %v1986, %v1990
          %v1993 = vunpack.c.l.s4 1983009808
          %v1994 = vunpack.c.0.s8 %v1993
          %v1995 = vlaneseq
          %v1996 = vshrl.u32 %v1995, 7
          %v1997 = vsub.s32 %v1994, %v1996
          %v1998 = vrot.slane %v1991, %v1997
          %v2000 = vadd.f32 %v1979, %v1998
          %v2003 = vunpack.c.l.s4 1983009808
          %v2004 = vunpack.c.0.s8 %v2003
          %v2005 = vlaneseq
          %v2006 = vshrl.u32 %v2005, 7
          %v2007 = vsub.s32 %v2004, %v2006
          %v2008 = vrot.slane %v2000, %v2007
          %v2009 = vcombine.high %v2008, %v2008
          %vm2012 = vcmask 1041408
          %v2013 = vsel %vm2012, %v2008, -inf
          %v2014 = vsel %vm2012, %v2009, -inf
          %v2015 = vmax.f32 %v2013, %v2014
          %2016 = vmax.xlane.f32.xlu0 %v2015
          %v2017 = vpop.xlane.xlu0 %2016
          %v2020 = vunpack.c.l.s4 269488144
          %v2021 = vunpack.c.0.s8 %v2020
          %v2022 = vlaneseq
          %v2023 = vshrl.u32 %v2022, 7
          %v2024 = vsub.s32 %v2021, %v2023
          %v2025 = vrot.slane %v2017, %v2024
          %v2027 = vsub.f32 %v2000, %v2025
          %v2028 = vmul.f32 %v2027, 1.442695
          %v2029 = vpow.pop %v2028
          %v2032 = vunpack.c.l.s4 1983009808
          %v2033 = vunpack.c.0.s8 %v2032
          %v2034 = vlaneseq
          %v2035 = vshrl.u32 %v2034, 7
          %v2036 = vsub.s32 %v2033, %v2035
          %v2037 = vrot.slane %v2029, %v2036
          %v2038 = vcombine.high %v2037, %v2037
          %v2041 = vsel %vm2012, %v2037, 0.0
          %v2042 = vsel %vm2012, %v2038, 0.0
          %v2043 = vadd.f32 %v2041, %v2042
          %2044 = vadd.xlane.f32.xlu0 %v2043
          %v2045 = vpop.xlane.xlu0 %2044
          %v2048 = vunpack.c.l.s4 269488144
          %v2049 = vunpack.c.0.s8 %v2048
          %v2050 = vlaneseq
          %v2051 = vshrl.u32 %v2050, 7
          %v2052 = vsub.s32 %v2049, %v2051
          %v2053 = vrot.slane %v2045, %v2052
          %v2055 = vrcp.pop %v2053
          %v2056 = vmul.f32 %v2029, %v2055
          %v2057 = vmul.f32 %v2056, %v2000
          %v2058 = vadd.f32 %v1978, %v2057
          %v2061 = vunpack.c.l.s4 1983009808
          %v2062 = vunpack.c.0.s8 %v2061
          %v2063 = vlaneseq
          %v2064 = vshrl.u32 %v2063, 7
          %v2065 = vsub.s32 %v2062, %v2064
          %v2066 = vrot.slane %v2058, %v2065
          %v2067 = vcombine.high %v2066, %v2066
          %2070 = vst [vmem:[%s11] sm:$0x3] %v2066
          %2071 = vst [vmem:[%s11 + $0x8] sm:$0x3] %v2067
          %v2074 = vrot.slane %v1845, 6
          %v2075 = vrot.slane %v1847, 6
          %2078 = vst [vmem:[%s11] sm:$0xc] %v2074
          %2079 = vst [vmem:[%s11 + $0x8] sm:$0xc] %v2075
          %v2082 = vunpack.c.l.s4 1983009808
          %v2083 = vunpack.c.0.s8 %v2082
          %v2084 = vlaneseq
          %v2085 = vshrl.u32 %v2084, 7
          %v2086 = vsub.s32 %v2083, %v2085
          %v2087 = vrot.slane %v2057, %v2086
          %v2088 = vcombine.low %v2087, %v2087
          %2091 = vst [vmem:[%s11] sm:$0x30] %v2088
          %2092 = vst [vmem:[%s11 + $0x8] sm:$0x30] %v2087
          %v2095 = vrot.slane %v1952, 2
          %v2096 = vrot.slane %v1954, 2
          %2099 = vst [vmem:[%s11] sm:$0xc0] %v2095
          %2100 = vst [vmem:[%s11 + $0x8] sm:$0xc0] %v2096
        $region95: #{_lambda_.1} parent=82 // pred_fallthru
          _
        // Predicated region
        $region96: #{_lambda_.1} parent=82 // pred_check
          %p2101 = pneg %p287
        $region97: #{_lambda_.1} parent=82 // pred_check_branch
          %2103 = sbr.rel (%p2101) target = $region99
        $region98: #{_lambda_.1} parent=82 // pred_region
          _
        $region99: #{_lambda_.1} parent=82 // pred_fallthru
          _
        // Predicated region
        $region100: #{_lambda_.1} parent=82 // pred_check
          %p2104 = pneg %p287
        $region101: #{_lambda_.1} parent=82 // pred_check_branch
          %2106 = sbr.rel (%p2104) target = $region103
        $region102: #{_lambda_.1} parent=82 // pred_region
          _
        $region103: #{_lambda_.1} parent=82 // pred_fallthru
          _
      $region83: #{_lambda_.1} parent=5 // pred_fallthru
        _
      %p2107 = scmp.le.s32.totalorder 2, %s18
      // Predicated region
      $region104: #{_lambda_.1} parent=5 // pred_check
        %p2108 = pneg %p2107
      $region105: #{_lambda_.1} parent=5 // pred_check_branch
        %2110 = sbr.rel (%p2108) target = $region107
      $region106: #{_lambda_.1} parent=5 // pred_region
        %s2111 = ssub.s32 %s18, 2
      $region107: #{_lambda_.1} parent=5 // pred_fallthru
        _
    $region6: #{_lambda_.1} parent=1 // loop_footer
      %s22 = sadd.s32 1, %s18
    $region7: #{_lambda_.1} parent=1 // loop_footer_branch
      %17 = sbr.rel target = $region3
    $region8: #{_lambda_.1} parent=1 // loop_exit
      _

</llo_original>
